<compile_context>
chip_gen: v6e
topology: v6e:2x2x1
jax: 0.10.0
libtpu: 0.0.40
codegen_flags: <defaults>
</compile_context>

<pallas_src>
import jax
import jax.numpy as jnp
from jax import lax
from jax.experimental import pallas as pl
from jax.experimental.pallas import tpu as pltpu


def _cpnn_kernel(x_ref, kwt_ref, w2_ref, gc_ref, slab_ref):
    """One batch tile of the CPNN forward pass.

    x_ref    : (tile_b, D)  f32   input rows (batch-tiled, double-buffered)
    kwt_ref  : (D, H)       f32   kohonen weights, pre-transposed (resident)
    w2_ref   : (1, H)       f32   ||w_h||^2 per hidden unit (resident)
    gc_ref   : (H, Wc)      f32   [G_fwd^T | G_rev^T | iota_H | 0-pad] (resident)
    slab_ref : (tile_b, Wc) f32   fused lane-dense output slab
    """
    x = x_ref[...]                                                     # (tb, D)

    # Squared-distance scores via the GEMM trick:
    #   ||x - w||^2 = ||x||^2 - 2 x.w + ||w||^2 ;  the per-row ||x||^2 term
    # does not affect the argmin and is dropped.
    xw = jnp.dot(x, kwt_ref[...], preferred_element_type=jnp.float32)  # (tb, H)
    d2 = w2_ref[...] - 2.0 * xw                                        # (tb, H)

    tb, H = d2.shape
    min_d = jnp.min(d2, axis=1, keepdims=True)                         # (tb, 1)
    hid = lax.broadcasted_iota(jnp.int32, (tb, H), 1)                  # (tb, H)
    # first index attaining the minimum (matches torch.argmin tie-breaking)
    winners = jnp.min(jnp.where(d2 == min_d, hid, H),
                      axis=1, keepdims=True)                           # (tb, 1)
    onehot = (hid == winners).astype(jnp.float32)                      # (tb, H)

    # Single fused one-hot matmul producing [logits | recos | winner | pad]
    # as one unmasked, fully lane-dense store.
    slab_ref[...] = jnp.dot(onehot, gc_ref[...],
                            preferred_element_type=jnp.float32)


def _round_up(x: int, m: int) -> int:
    return ((x + m - 1) // m) * m


def _vmem_budget_bytes() -> int:
    """Per-generation VMEM budget = physical VMEM minus headroom."""
    try:
        info = pltpu.get_tpu_info()
        cap = int(getattr(info, "vmem_capacity_bytes", 64 << 20))
    except Exception:
        cap = 64 << 20          # conservative (v7x-sized) fallback
    return max(cap - (16 << 20), 16 << 20)


def _pick_tile_b(B: int, bytes_per_row: int, resident_bytes: int,
                 budget: int) -> int:
    """Largest batch tile whose double-buffered tiles + resident weights fit."""
    if B <= 256:
        return B                # full-dim block: always legal, single grid step
    tb = 128
    for cand in (256, 512, 1024):
        if resident_bytes + 2 * cand * bytes_per_row + (2 << 20) <= budget:
            tb = cand
    # keep >= 2 grid steps so ("parallel",) can shard across both v7x TCs
    while tb > 128 and pl.cdiv(B, tb) < 2:
        tb //= 2
    return tb


def cpnn_forward(x, kohonen_weights, g_fwd, g_rev):
    """Pallas implementation of FullCPNN.forward.

    Args:
      x:                (B, ...) input; flattened to (B, input_size).
      kohonen_weights:  (hidden_size, input_size)
      g_fwd:            (output_size, hidden_size)
      g_rev:            (input_size, hidden_size)
    Returns:
      (logits (B, output_size), recos (B, input_size), winners (B,) int32)
    """
    B = x.shape[0]
    xf = x.reshape(B, -1).astype(jnp.float32)
    D = xf.shape[1]
    H = kohonen_weights.shape[0]
    O = g_fwd.shape[0]

    kw = kohonen_weights.astype(jnp.float32)             # (H, D)
    kwt = kw.T                                           # (D, H)  MXU-ready
    w2 = jnp.sum(kw * kw, axis=1)[None, :]               # (1, H)

    # Fused, lane-dense output weight: [G_fwd^T | G_rev^T | iota_H | 0-pad].
    # The iota column encodes the winner index exactly (one-hot selection of
    # small integers is exact in f32 MXU accumulation).
    Wc = _round_up(O + D + 1, 128)
    g_combo = jnp.concatenate(
        [g_fwd.astype(jnp.float32).T,                    # (H, O)
         g_rev.astype(jnp.float32).T,                    # (H, D)
         jnp.arange(H, dtype=jnp.float32)[:, None],      # (H, 1) winner column
         jnp.zeros((H, Wc - (O + D + 1)), jnp.float32)], # lane padding
        axis=1)                                          # (H, Wc)

    resident_bytes = 4 * (D * H + H + H * Wc)            # single-buffered
    bytes_per_row = 4 * (D + Wc)                         # x tile + slab tile
    budget = _vmem_budget_bytes()
    tile_b = _pick_tile_b(B, bytes_per_row, resident_bytes, budget)
    n_btiles = pl.cdiv(B, tile_b)

    # Worst case assumes the fallback (double-buffered) weights.
    vmem_est = 2 * resident_bytes + 2 * tile_b * bytes_per_row
    vmem_limit = int(min(max(vmem_est + (4 << 20), 16 << 20), budget))

    cost = pl.CostEstimate(
        flops=2 * B * D * H + 2 * B * H * Wc,
        transcendentals=0,
        bytes_accessed=4 * (B * D + D * H + H + H * Wc + B * Wc))

    def build(single_buffer_weights: bool):
        def resident(shape):
            if single_buffer_weights:
                return pl.BlockSpec(shape, lambda i: (0, 0),
                                    pipeline_mode=pl.Buffered(1))
            return pl.BlockSpec(shape, lambda i: (0, 0))

        return pl.pallas_call(
            _cpnn_kernel,
            out_shape=jax.ShapeDtypeStruct((B, Wc), jnp.float32),
            grid=(n_btiles,),
            in_specs=[
                pl.BlockSpec((tile_b, D), lambda i: (i, 0)),  # x (batch-tiled)
                resident((D, H)),                             # kohonen^T
                resident((1, H)),                             # ||w||^2
                resident((H, Wc)),                            # fused G weights
            ],
            out_specs=pl.BlockSpec((tile_b, Wc), lambda i: (i, 0)),
            compiler_params=pltpu.CompilerParams(
                dimension_semantics=("parallel",),
                vmem_limit_bytes=vmem_limit),
            cost_estimate=cost,
        )

    try:
        slab = build(True)(xf, kwt, w2, g_combo)
    except Exception:
        # Fallback: default (double-buffered) resident weights if the runtime
        # rejects pipeline_mode=pl.Buffered(1).
        slab = build(False)(xf, kwt, w2, g_combo)

    logits = slab[:, :O]
    recos = slab[:, O:O + D]
    winners = jnp.rint(slab[:, O + D]).astype(jnp.int32)
    return logits, recos, winners


def _l2_normalize_rows(w):
    # matches torch F.normalize(w, p=2, dim=1)
    norm = jnp.sqrt(jnp.sum(w * w, axis=1, keepdims=True))
    return w / jnp.maximum(norm, 1e-12)


if __name__ == "__main__":
    # Small shapes consistent with the module: x is (B, C, H, W), flattened.
    B, C, Himg, Wimg = 2, 4, 16, 16
    input_size = C * Himg * Wimg      # 1024
    hidden_size = 32
    output_size = 8

    key = jax.random.PRNGKey(0)
    kx, kk, kf, kr = jax.random.split(key, 4)

    x = jax.random.normal(kx, (B, C, Himg, Wimg), dtype=jnp.float32)

    kohonen_weights = _l2_normalize_rows(
        jax.random.normal(kk, (hidden_size, input_size), dtype=jnp.float32))
    g_fwd = _l2_normalize_rows(
        jax.random.normal(kf, (output_size, hidden_size), dtype=jnp.float32))
    g_rev = _l2_normalize_rows(
        jax.random.normal(kr, (input_size, hidden_size), dtype=jnp.float32))

    logits, recos, winners = cpnn_forward(x, kohonen_weights, g_fwd, g_rev)
    jax.block_until_ready((logits, recos, winners))

    # Pure-JAX reference (same math as torch.cdist + argmin + one-hot matmuls)
    xf = x.reshape(B, -1)
    dist = jnp.sqrt(jnp.maximum(
        jnp.sum((xf[:, None, :] - kohonen_weights[None, :, :]) ** 2, axis=-1),
        0.0))
    ref_winners = jnp.argmin(dist, axis=1)
    ref_onehot = jax.nn.one_hot(ref_winners, hidden_size, dtype=jnp.float32)
    ref_logits = ref_onehot @ g_fwd.T
    ref_recos = ref_onehot @ g_rev.T

    assert winners.shape == (B,)
    assert logits.shape == (B, output_size)
    assert recos.shape == (B, input_size)
    assert jnp.array_equal(winners, ref_winners.astype(jnp.int32))
    assert jnp.allclose(logits, ref_logits, atol=1e-5)
    assert jnp.allclose(recos, ref_recos, atol=1e-5)

    print("KERNEL_OK")
</pallas_src>

<mosaic_0001>
module attributes {stable_mosaic.version = 11 : i64} {
  func.func @_cpnn_kernel(%arg0: i32, %arg1: memref<2x1024xf32, #tpu.memory_space<vmem>>, %arg2: memref<1024x32xf32, #tpu.memory_space<vmem>>, %arg3: memref<1x32xf32, #tpu.memory_space<vmem>>, %arg4: memref<32x1152xf32, #tpu.memory_space<vmem>>, %arg5: memref<2x1152xf32, #tpu.memory_space<vmem>>) attributes {dimension_semantics = [#tpu.dimension_semantics<parallel>], iteration_bounds = array<i64: 1>, scalar_prefetch = 0 : i64, scratch_operands = 0 : i64, tpu.core_type = #tpu.core_type<tc>, window_params = [{transform_indices = @transform_0, window_bounds = array<i64: 2, 1024>}, {pipeline_mode = #tpu.pipeline_mode<synchronous>, transform_indices = @transform_1, window_bounds = array<i64: 1024, 32>}, {pipeline_mode = #tpu.pipeline_mode<synchronous>, transform_indices = @transform_2, window_bounds = array<i64: 1, 32>}, {pipeline_mode = #tpu.pipeline_mode<synchronous>, transform_indices = @transform_3, window_bounds = array<i64: 32, 1152>}, {transform_indices = @transform_4, window_bounds = array<i64: 2, 1152>}]} {
    %c0 = arith.constant 0 : index
    %c0_0 = arith.constant 0 : index
    %0 = vector.load %arg1[%c0, %c0_0] : memref<2x1024xf32, #tpu.memory_space<vmem>>, vector<2x1024xf32>
    %c0_1 = arith.constant 0 : index
    %c0_2 = arith.constant 0 : index
    %1 = vector.load %arg2[%c0_1, %c0_2] : memref<1024x32xf32, #tpu.memory_space<vmem>>, vector<1024x32xf32>
    %cst = arith.constant dense<0.000000e+00> : vector<2x32xf32>
    %2 = tpu.matmul %0, %1, %cst {dimension_numbers = #tpu.dot_dimension_numbers<[1], [0], [0], [1], [0, 0, 1, 1], [], []>} : vector<2x1024xf32>, vector<1024x32xf32>, vector<2x32xf32> -> vector<2x32xf32>
    %c0_3 = arith.constant 0 : index
    %c0_4 = arith.constant 0 : index
    %3 = vector.load %arg3[%c0_3, %c0_4] : memref<1x32xf32, #tpu.memory_space<vmem>>, vector<1x32xf32>
    %cst_5 = arith.constant 2.000000e+00 : f32
    %4 = vector.broadcast %cst_5 : f32 to vector<2x32xf32>
    %5 = arith.mulf %4, %2 : vector<2x32xf32>
    %6 = vector.broadcast %3 : vector<1x32xf32> to vector<2x32xf32>
    %7 = arith.subf %6, %5 : vector<2x32xf32>
    %cst_6 = arith.constant dense<0x7F800000> : vector<2xf32>
    %8 = vector.multi_reduction <minimumf>, %7, %cst_6 [1] : vector<2x32xf32> to vector<2xf32>
    %9 = vector.shape_cast %8 : vector<2xf32> to vector<2x1xf32>
    %10 = tpu.iota {dimensions = array<i32: 1>} : vector<2x32xi32>
    %11 = vector.broadcast %9 : vector<2x1xf32> to vector<2x32xf32>
    %12 = arith.cmpf oeq, %7, %11 : vector<2x32xf32>
    %c32_i32 = arith.constant 32 : i32
    %13 = vector.broadcast %c32_i32 : i32 to vector<2x32xi32>
    %14 = arith.select %12, %10, %13 : vector<2x32xi1>, vector<2x32xi32>
    %cst_7 = arith.constant dense<2147483647> : vector<2xi32>
    %15 = vector.multi_reduction <minsi>, %14, %cst_7 [1] : vector<2x32xi32> to vector<2xi32>
    %16 = vector.shape_cast %15 : vector<2xi32> to vector<2x1xi32>
    %17 = vector.broadcast %16 : vector<2x1xi32> to vector<2x32xi32>
    %18 = arith.cmpi eq, %10, %17 : vector<2x32xi32>
    %19 = arith.extui %18 : vector<2x32xi1> to vector<2x32xi32>
    %20 = arith.sitofp %19 : vector<2x32xi32> to vector<2x32xf32>
    %c0_8 = arith.constant 0 : index
    %c0_9 = arith.constant 0 : index
    %21 = vector.load %arg4[%c0_8, %c0_9] : memref<32x1152xf32, #tpu.memory_space<vmem>>, vector<32x1152xf32>
    %cst_10 = arith.constant dense<0.000000e+00> : vector<2x1152xf32>
    %22 = tpu.matmul %20, %21, %cst_10 {dimension_numbers = #tpu.dot_dimension_numbers<[1], [0], [0], [1], [0, 0, 1, 1], [], []>} : vector<2x32xf32>, vector<32x1152xf32>, vector<2x1152xf32> -> vector<2x1152xf32>
    %c0_11 = arith.constant 0 : index
    %c0_12 = arith.constant 0 : index
    %23 = vector.load %arg5[%c0_11, %c0_12] : memref<2x1152xf32, #tpu.memory_space<vmem>>, vector<2x1152xf32>
    tpu.vector_store %arg5[%c0_11, %c0_12], %22 {strides = array<i32>} : memref<2x1152xf32, #tpu.memory_space<vmem>>, vector<2x1152xf32>,
    return
  }
  func.func @transform_0(%arg0: i32) -> (i32, i32) {
    %c0_i32 = arith.constant 0 : i32
    %c0_i32_0 = arith.constant 0 : i32
    return %arg0, %c0_i32 : i32, i32
  }
  func.func @transform_1(%arg0: i32) -> (i32, i32) {
    %c0_i32 = arith.constant 0 : i32
    %c0_i32_0 = arith.constant 0 : i32
    %c0_i32_1 = arith.constant 0 : i32
    return %c0_i32, %c0_i32_0 : i32, i32
  }
  func.func @transform_2(%arg0: i32) -> (i32, i32) {
    %c0_i32 = arith.constant 0 : i32
    %c0_i32_0 = arith.constant 0 : i32
    %c0_i32_1 = arith.constant 0 : i32
    return %c0_i32, %c0_i32_0 : i32, i32
  }
  func.func @transform_3(%arg0: i32) -> (i32, i32) {
    %c0_i32 = arith.constant 0 : i32
    %c0_i32_0 = arith.constant 0 : i32
    %c0_i32_1 = arith.constant 0 : i32
    return %c0_i32, %c0_i32_0 : i32, i32
  }
  func.func @transform_4(%arg0: i32) -> (i32, i32) {
    %c0_i32 = arith.constant 0 : i32
    %c0_i32_0 = arith.constant 0 : i32
    return %arg0, %c0_i32 : i32, i32
  }
}

module attributes {stable_mosaic.version = 11 : i64} {
  func.func @_cpnn_kernel(%arg0: i32, %arg1: memref<2x1024xf32, #tpu.memory_space<vmem>>, %arg2: memref<1024x32xf32, #tpu.memory_space<vmem>>, %arg3: memref<1x32xf32, #tpu.memory_space<vmem>>, %arg4: memref<32x1152xf32, #tpu.memory_space<vmem>>, %arg5: memref<2x1152xf32, #tpu.memory_space<vmem>>) attributes {dimension_semantics = [#tpu.dimension_semantics<parallel>], iteration_bounds = array<i64: 1>, scalar_prefetch = 0 : i64, scratch_operands = 0 : i64, tpu.core_type = #tpu.core_type<tc>, window_params = [{transform_indices = @transform_0, window_bounds = array<i64: 2, 1024>}, {pipeline_mode = #tpu.pipeline_mode<synchronous>, transform_indices = @transform_1, window_bounds = array<i64: 1024, 32>}, {pipeline_mode = #tpu.pipeline_mode<synchronous>, transform_indices = @transform_2, window_bounds = array<i64: 1, 32>}, {pipeline_mode = #tpu.pipeline_mode<synchronous>, transform_indices = @transform_3, window_bounds = array<i64: 32, 1152>}, {transform_indices = @transform_4, window_bounds = array<i64: 2, 1152>}]} {
    %c0 = arith.constant 0 : index
    %c0_0 = arith.constant 0 : index
    %0 = vector.load %arg1[%c0, %c0_0] : memref<2x1024xf32, #tpu.memory_space<vmem>>, vector<2x1024xf32>
    %c0_1 = arith.constant 0 : index
    %c0_2 = arith.constant 0 : index
    %1 = vector.load %arg2[%c0_1, %c0_2] : memref<1024x32xf32, #tpu.memory_space<vmem>>, vector<1024x32xf32>
    %cst = arith.constant dense<0.000000e+00> : vector<2x32xf32>
    %2 = tpu.matmul %0, %1, %cst {dimension_numbers = #tpu.dot_dimension_numbers<[1], [0], [0], [1], [0, 0, 1, 1], [], []>} : vector<2x1024xf32>, vector<1024x32xf32>, vector<2x32xf32> -> vector<2x32xf32>
    %c0_3 = arith.constant 0 : index
    %c0_4 = arith.constant 0 : index
    %3 = vector.load %arg3[%c0_3, %c0_4] : memref<1x32xf32, #tpu.memory_space<vmem>>, vector<1x32xf32>
    %cst_5 = arith.constant 2.000000e+00 : f32
    %4 = vector.broadcast %cst_5 : f32 to vector<2x32xf32>
    %5 = arith.mulf %4, %2 : vector<2x32xf32>
    %6 = vector.broadcast %3 : vector<1x32xf32> to vector<2x32xf32>
    %7 = arith.subf %6, %5 : vector<2x32xf32>
    %cst_6 = arith.constant dense<0x7F800000> : vector<2xf32>
    %8 = vector.multi_reduction <minimumf>, %7, %cst_6 [1] : vector<2x32xf32> to vector<2xf32>
    %9 = vector.shape_cast %8 : vector<2xf32> to vector<2x1xf32>
    %10 = tpu.iota {dimensions = array<i32: 1>} : vector<2x32xi32>
    %11 = vector.broadcast %9 : vector<2x1xf32> to vector<2x32xf32>
    %12 = arith.cmpf oeq, %7, %11 : vector<2x32xf32>
    %c32_i32 = arith.constant 32 : i32
    %13 = vector.broadcast %c32_i32 : i32 to vector<2x32xi32>
    %14 = arith.select %12, %10, %13 : vector<2x32xi1>, vector<2x32xi32>
    %cst_7 = arith.constant dense<2147483647> : vector<2xi32>
    %15 = vector.multi_reduction <minsi>, %14, %cst_7 [1] : vector<2x32xi32> to vector<2xi32>
    %16 = vector.shape_cast %15 : vector<2xi32> to vector<2x1xi32>
    %17 = vector.broadcast %16 : vector<2x1xi32> to vector<2x32xi32>
    %18 = arith.cmpi eq, %10, %17 : vector<2x32xi32>
    %19 = arith.extui %18 : vector<2x32xi1> to vector<2x32xi32>
    %20 = arith.sitofp %19 : vector<2x32xi32> to vector<2x32xf32>
    %c0_8 = arith.constant 0 : index
    %c0_9 = arith.constant 0 : index
    %21 = vector.load %arg4[%c0_8, %c0_9] : memref<32x1152xf32, #tpu.memory_space<vmem>>, vector<32x1152xf32>
    %cst_10 = arith.constant dense<0.000000e+00> : vector<2x1152xf32>
    %22 = tpu.matmul %20, %21, %cst_10 {dimension_numbers = #tpu.dot_dimension_numbers<[1], [0], [0], [1], [0, 0, 1, 1], [], []>} : vector<2x32xf32>, vector<32x1152xf32>, vector<2x1152xf32> -> vector<2x1152xf32>
    %c0_11 = arith.constant 0 : index
    %c0_12 = arith.constant 0 : index
    %23 = vector.load %arg5[%c0_11, %c0_12] : memref<2x1152xf32, #tpu.memory_space<vmem>>, vector<2x1152xf32>
    tpu.vector_store %arg5[%c0_11, %c0_12], %22 {strides = array<i32>} : memref<2x1152xf32, #tpu.memory_space<vmem>>, vector<2x1152xf32>,
    return
  }
  func.func @transform_0(%arg0: i32) -> (i32, i32) {
    %c0_i32 = arith.constant 0 : i32
    %c0_i32_0 = arith.constant 0 : i32
    return %arg0, %c0_i32 : i32, i32
  }
  func.func @transform_1(%arg0: i32) -> (i32, i32) {
    %c0_i32 = arith.constant 0 : i32
    %c0_i32_0 = arith.constant 0 : i32
    %c0_i32_1 = arith.constant 0 : i32
    return %c0_i32, %c0_i32_0 : i32, i32
  }
  func.func @transform_2(%arg0: i32) -> (i32, i32) {
    %c0_i32 = arith.constant 0 : i32
    %c0_i32_0 = arith.constant 0 : i32
    %c0_i32_1 = arith.constant 0 : i32
    return %c0_i32, %c0_i32_0 : i32, i32
  }
  func.func @transform_3(%arg0: i32) -> (i32, i32) {
    %c0_i32 = arith.constant 0 : i32
    %c0_i32_0 = arith.constant 0 : i32
    %c0_i32_1 = arith.constant 0 : i32
    return %c0_i32, %c0_i32_0 : i32, i32
  }
  func.func @transform_4(%arg0: i32) -> (i32, i32) {
    %c0_i32 = arith.constant 0 : i32
    %c0_i32_0 = arith.constant 0 : i32
    return %arg0, %c0_i32 : i32, i32
  }
}

</mosaic_0001>

<llo_original>
// kernel: tpu_custom_call.1
$region0: #{tpu_custom_call.1}
  #allocation0 [shape = 'u32[]', space=smem, size = 0x4, offset = 0x4, fixed_abs, tag = 'smem constant byte address 0x4 - core index']
  #allocation1 [shape = 'u32[144,128]{1,0:T(1,128)}', space=vmem, size = 0x12000, scoped, tag = 'internal scratch']
  %s0 = inlined_call_operand.vmem [shape: f32[2,1024], index: 0, kind: input, shape index: {}]
  %s1 = inlined_call_operand.vmem [shape: f32[1024,32], index: 1, kind: input, shape index: {}]
  %s2 = inlined_call_operand.vmem [shape: f32[1,32], index: 2, kind: input, shape index: {}]
  %s3 = inlined_call_operand.vmem [shape: f32[32,1152], index: 3, kind: input, shape index: {}]
  %s4 = inlined_call_operand.hbm [shape: f32[2,1152], index: 4, kind: output, shape index: {}]
  %s5 = sld [smem:[#allocation0]]
  $region26: #{tpu_custom_call.1} parent=0
    _
  %s7 = ssub.s32 1, %s5
  %s8 = scalar_select 0, %s7, %s5
  $region1: #{tpu_custom_call.1} parent=0
    #allocation2 [shape = 'u8[9216]{0}', space=vmem, size = 0x2400, scoped, tag = 'output window, operand 0, single buffered']
    #allocation3 [shape = 's32[1]{0}', space=sflag, size = 0x4, scoped, tag = 'scoped memory for tpu_custom_call.1']
    %9 = vsyncpa [#allocation3], 0
    // Predicated region
    $region2: #{tpu_custom_call.1} parent=1 // pred_check
      _
    $region3: #{tpu_custom_call.1} parent=1 // pred_check_branch
      %11 = sbr.rel (0) target = $region5
    $region4: #{tpu_custom_call.1} parent=1 // pred_region
      _
    $region5: #{tpu_custom_call.1} parent=1 // pred_fallthru
      _
    // Predicated region
    $region6: #{tpu_custom_call.1} parent=1 // pred_check
      _
    $region7: #{tpu_custom_call.1} parent=1 // pred_check_branch
      %13 = sbr.rel (0) target = $region9
    $region8: #{tpu_custom_call.1} parent=1 // pred_region
      _
    $region9: #{tpu_custom_call.1} parent=1 // pred_fallthru
      _
    // Predicated region
    $region10: #{tpu_custom_call.1} parent=1 // pred_check
      _
    $region11: #{tpu_custom_call.1} parent=1 // pred_check_branch
      %15 = sbr.rel (0) target = $region13
    $region12: #{tpu_custom_call.1} parent=1 // pred_region
      _
    $region13: #{tpu_custom_call.1} parent=1 // pred_fallthru
      _
    // Predicated region
    $region14: #{tpu_custom_call.1} parent=1 // pred_check
      _
    $region15: #{tpu_custom_call.1} parent=1 // pred_check_branch
      %17 = sbr.rel (0) target = $region17
    $region16: #{tpu_custom_call.1} parent=1 // pred_region
      _
    $region17: #{tpu_custom_call.1} parent=1 // pred_fallthru
      _
    %v18 = vld [vmem:[%s0] sm:$0xff]
    %v19 = vld [vmem:[%s0 + $0x8] sm:$0xff]
    %v20 = vld [vmem:[%s1] sm:$0xff]
    %v21 = vld [vmem:[%s1 + $0x8] sm:$0xff]
    %v22 = vld [vmem:[%s1 + $0x10] sm:$0xff]
    %v23 = vld [vmem:[%s1 + $0x18] sm:$0xff]
    %v24 = vld [vmem:[%s1 + $0x20] sm:$0xff]
    %v25 = vld [vmem:[%s1 + $0x28] sm:$0xff]
    %v26 = vld [vmem:[%s1 + $0x30] sm:$0xff]
    %v27 = vld [vmem:[%s1 + $0x38] sm:$0xff]
    %v28 = vld [vmem:[%s1 + $0x40] sm:$0xff]
    %v29 = vld [vmem:[%s1 + $0x48] sm:$0xff]
    %v30 = vld [vmem:[%s1 + $0x50] sm:$0xff]
    %v31 = vld [vmem:[%s1 + $0x58] sm:$0xff]
    %v32 = vld [vmem:[%s1 + $0x60] sm:$0xff]
    %v33 = vld [vmem:[%s1 + $0x68] sm:$0xff]
    %v34 = vld [vmem:[%s1 + $0x70] sm:$0xff]
    %v35 = vld [vmem:[%s1 + $0x78] sm:$0xff]
    %v36 = vld [vmem:[%s1 + $0x80] sm:$0xff]
    %v37 = vld [vmem:[%s1 + $0x88] sm:$0xff]
    %v38 = vld [vmem:[%s1 + $0x90] sm:$0xff]
    %v39 = vld [vmem:[%s1 + $0x98] sm:$0xff]
    %v40 = vld [vmem:[%s1 + $0xa0] sm:$0xff]
    %v41 = vld [vmem:[%s1 + $0xa8] sm:$0xff]
    %v42 = vld [vmem:[%s1 + $0xb0] sm:$0xff]
    %v43 = vld [vmem:[%s1 + $0xb8] sm:$0xff]
    %v44 = vld [vmem:[%s1 + $0xc0] sm:$0xff]
    %v45 = vld [vmem:[%s1 + $0xc8] sm:$0xff]
    %v46 = vld [vmem:[%s1 + $0xd0] sm:$0xff]
    %v47 = vld [vmem:[%s1 + $0xd8] sm:$0xff]
    %v48 = vld [vmem:[%s1 + $0xe0] sm:$0xff]
    %v49 = vld [vmem:[%s1 + $0xe8] sm:$0xff]
    %v50 = vld [vmem:[%s1 + $0xf0] sm:$0xff]
    %v51 = vld [vmem:[%s1 + $0xf8] sm:$0xff]
    %v52 = vld [vmem:[%s1 + $0x100] sm:$0xff]
    %v53 = vld [vmem:[%s1 + $0x108] sm:$0xff]
    %v54 = vld [vmem:[%s1 + $0x110] sm:$0xff]
    %v55 = vld [vmem:[%s1 + $0x118] sm:$0xff]
    %v56 = vld [vmem:[%s1 + $0x120] sm:$0xff]
    %v57 = vld [vmem:[%s1 + $0x128] sm:$0xff]
    %v58 = vld [vmem:[%s1 + $0x130] sm:$0xff]
    %v59 = vld [vmem:[%s1 + $0x138] sm:$0xff]
    %v60 = vld [vmem:[%s1 + $0x140] sm:$0xff]
    %v61 = vld [vmem:[%s1 + $0x148] sm:$0xff]
    %v62 = vld [vmem:[%s1 + $0x150] sm:$0xff]
    %v63 = vld [vmem:[%s1 + $0x158] sm:$0xff]
    %v64 = vld [vmem:[%s1 + $0x160] sm:$0xff]
    %v65 = vld [vmem:[%s1 + $0x168] sm:$0xff]
    %v66 = vld [vmem:[%s1 + $0x170] sm:$0xff]
    %v67 = vld [vmem:[%s1 + $0x178] sm:$0xff]
    %v68 = vld [vmem:[%s1 + $0x180] sm:$0xff]
    %v69 = vld [vmem:[%s1 + $0x188] sm:$0xff]
    %v70 = vld [vmem:[%s1 + $0x190] sm:$0xff]
    %v71 = vld [vmem:[%s1 + $0x198] sm:$0xff]
    %v72 = vld [vmem:[%s1 + $0x1a0] sm:$0xff]
    %v73 = vld [vmem:[%s1 + $0x1a8] sm:$0xff]
    %v74 = vld [vmem:[%s1 + $0x1b0] sm:$0xff]
    %v75 = vld [vmem:[%s1 + $0x1b8] sm:$0xff]
    %v76 = vld [vmem:[%s1 + $0x1c0] sm:$0xff]
    %v77 = vld [vmem:[%s1 + $0x1c8] sm:$0xff]
    %v78 = vld [vmem:[%s1 + $0x1d0] sm:$0xff]
    %v79 = vld [vmem:[%s1 + $0x1d8] sm:$0xff]
    %v80 = vld [vmem:[%s1 + $0x1e0] sm:$0xff]
    %v81 = vld [vmem:[%s1 + $0x1e8] sm:$0xff]
    %v82 = vld [vmem:[%s1 + $0x1f0] sm:$0xff]
    %v83 = vld [vmem:[%s1 + $0x1f8] sm:$0xff]
    %v84 = vld [vmem:[%s1 + $0x200] sm:$0xff]
    %v85 = vld [vmem:[%s1 + $0x208] sm:$0xff]
    %v86 = vld [vmem:[%s1 + $0x210] sm:$0xff]
    %v87 = vld [vmem:[%s1 + $0x218] sm:$0xff]
    %v88 = vld [vmem:[%s1 + $0x220] sm:$0xff]
    %v89 = vld [vmem:[%s1 + $0x228] sm:$0xff]
    %v90 = vld [vmem:[%s1 + $0x230] sm:$0xff]
    %v91 = vld [vmem:[%s1 + $0x238] sm:$0xff]
    %v92 = vld [vmem:[%s1 + $0x240] sm:$0xff]
    %v93 = vld [vmem:[%s1 + $0x248] sm:$0xff]
    %v94 = vld [vmem:[%s1 + $0x250] sm:$0xff]
    %v95 = vld [vmem:[%s1 + $0x258] sm:$0xff]
    %v96 = vld [vmem:[%s1 + $0x260] sm:$0xff]
    %v97 = vld [vmem:[%s1 + $0x268] sm:$0xff]
    %v98 = vld [vmem:[%s1 + $0x270] sm:$0xff]
    %v99 = vld [vmem:[%s1 + $0x278] sm:$0xff]
    %v100 = vld [vmem:[%s1 + $0x280] sm:$0xff]
    %v101 = vld [vmem:[%s1 + $0x288] sm:$0xff]
    %v102 = vld [vmem:[%s1 + $0x290] sm:$0xff]
    %v103 = vld [vmem:[%s1 + $0x298] sm:$0xff]
    %v104 = vld [vmem:[%s1 + $0x2a0] sm:$0xff]
    %v105 = vld [vmem:[%s1 + $0x2a8] sm:$0xff]
    %v106 = vld [vmem:[%s1 + $0x2b0] sm:$0xff]
    %v107 = vld [vmem:[%s1 + $0x2b8] sm:$0xff]
    %v108 = vld [vmem:[%s1 + $0x2c0] sm:$0xff]
    %v109 = vld [vmem:[%s1 + $0x2c8] sm:$0xff]
    %v110 = vld [vmem:[%s1 + $0x2d0] sm:$0xff]
    %v111 = vld [vmem:[%s1 + $0x2d8] sm:$0xff]
    %v112 = vld [vmem:[%s1 + $0x2e0] sm:$0xff]
    %v113 = vld [vmem:[%s1 + $0x2e8] sm:$0xff]
    %v114 = vld [vmem:[%s1 + $0x2f0] sm:$0xff]
    %v115 = vld [vmem:[%s1 + $0x2f8] sm:$0xff]
    %v116 = vld [vmem:[%s1 + $0x300] sm:$0xff]
    %v117 = vld [vmem:[%s1 + $0x308] sm:$0xff]
    %v118 = vld [vmem:[%s1 + $0x310] sm:$0xff]
    %v119 = vld [vmem:[%s1 + $0x318] sm:$0xff]
    %v120 = vld [vmem:[%s1 + $0x320] sm:$0xff]
    %v121 = vld [vmem:[%s1 + $0x328] sm:$0xff]
    %v122 = vld [vmem:[%s1 + $0x330] sm:$0xff]
    %v123 = vld [vmem:[%s1 + $0x338] sm:$0xff]
    %v124 = vld [vmem:[%s1 + $0x340] sm:$0xff]
    %v125 = vld [vmem:[%s1 + $0x348] sm:$0xff]
    %v126 = vld [vmem:[%s1 + $0x350] sm:$0xff]
    %v127 = vld [vmem:[%s1 + $0x358] sm:$0xff]
    %v128 = vld [vmem:[%s1 + $0x360] sm:$0xff]
    %v129 = vld [vmem:[%s1 + $0x368] sm:$0xff]
    %v130 = vld [vmem:[%s1 + $0x370] sm:$0xff]
    %v131 = vld [vmem:[%s1 + $0x378] sm:$0xff]
    %v132 = vld [vmem:[%s1 + $0x380] sm:$0xff]
    %v133 = vld [vmem:[%s1 + $0x388] sm:$0xff]
    %v134 = vld [vmem:[%s1 + $0x390] sm:$0xff]
    %v135 = vld [vmem:[%s1 + $0x398] sm:$0xff]
    %v136 = vld [vmem:[%s1 + $0x3a0] sm:$0xff]
    %v137 = vld [vmem:[%s1 + $0x3a8] sm:$0xff]
    %v138 = vld [vmem:[%s1 + $0x3b0] sm:$0xff]
    %v139 = vld [vmem:[%s1 + $0x3b8] sm:$0xff]
    %v140 = vld [vmem:[%s1 + $0x3c0] sm:$0xff]
    %v141 = vld [vmem:[%s1 + $0x3c8] sm:$0xff]
    %v142 = vld [vmem:[%s1 + $0x3d0] sm:$0xff]
    %v143 = vld [vmem:[%s1 + $0x3d8] sm:$0xff]
    %v144 = vld [vmem:[%s1 + $0x3e0] sm:$0xff]
    %v145 = vld [vmem:[%s1 + $0x3e8] sm:$0xff]
    %v146 = vld [vmem:[%s1 + $0x3f0] sm:$0xff]
    %v147 = vld [vmem:[%s1 + $0x3f8] sm:$0xff]
    %v150 = vcombine.high %v18, %v18
    %v152 = vunpack.c.l.s4 1983009808
    %v153 = vunpack.c.0.s8 %v152
    %v154 = vlaneseq
    %v155 = vshrl.u32 %v154, 7
    %v156 = vsub.s32 %v153, %v155
    %v157 = vrot.slane %v18, %v156
    %v159 = vunpack.c.l.s4 1983009808
    %v160 = vunpack.c.0.s8 %v159
    %v161 = vlaneseq
    %v162 = vshrl.u32 %v161, 7
    %v163 = vsub.s32 %v160, %v162
    %v164 = vrot.slane %v150, %v163
    %v165 = vcombine.high %v157, %v157
    %v166 = vcombine.high %v164, %v164
    %v167 = vcombine.high %v19, %v19
    %v169 = vunpack.c.l.s4 1983009808
    %v170 = vunpack.c.0.s8 %v169
    %v171 = vlaneseq
    %v172 = vshrl.u32 %v171, 7
    %v173 = vsub.s32 %v170, %v172
    %v174 = vrot.slane %v19, %v173
    %v176 = vunpack.c.l.s4 1983009808
    %v177 = vunpack.c.0.s8 %v176
    %v178 = vlaneseq
    %v179 = vshrl.u32 %v178, 7
    %v180 = vsub.s32 %v177, %v179
    %v181 = vrot.slane %v167, %v180
    %v182 = vcombine.high %v174, %v174
    %v183 = vcombine.high %v181, %v181
    %192 = vmatprep.subr.mxu0 0.0
    %193 = vmatpush1.msra.mxu0 %v35
    %194 = vmatprep.subr.mxu0 0.0
    %195 = vmatpush1.msra.mxu0 %v34
    %196 = vmatprep.subr.mxu0 0.0
    %197 = vmatpush1.msra.mxu0 %v33
    %198 = vmatprep.subr.mxu0 0.0
    %199 = vmatpush1.msra.mxu0 %v32
    %200 = vmatprep.subr.mxu0 0.0
    %201 = vmatpush1.msra.mxu0 %v31
    %202 = vmatprep.subr.mxu0 0.0
    %203 = vmatpush1.msra.mxu0 %v30
    %204 = vmatprep.subr.mxu0 0.0
    %205 = vmatpush1.msra.mxu0 %v29
    %206 = vmatprep.subr.mxu0 0.0
    %207 = vmatpush1.msra.mxu0 %v28
    %208 = vmatprep.subr.mxu0 0.0
    %209 = vmatpush1.msra.mxu0 %v27
    %210 = vmatprep.subr.mxu0 0.0
    %211 = vmatpush1.msra.mxu0 %v26
    %212 = vmatprep.subr.mxu0 0.0
    %213 = vmatpush1.msra.mxu0 %v25
    %214 = vmatprep.subr.mxu0 0.0
    %215 = vmatpush1.msra.mxu0 %v24
    %216 = vmatprep.subr.mxu0 0.0
    %217 = vmatpush1.msra.mxu0 %v23
    %218 = vmatprep.subr.mxu0 0.0
    %219 = vmatpush1.msra.mxu0 %v22
    %220 = vmatprep.subr.mxu0 0.0
    %221 = vmatpush1.msra.mxu0 %v21
    %222 = vmatprep.subr.mxu0 0.0
    %223 = vmatpush1.msra.mxu0 %v20
    %224 = vmatprep.subr.mxu0 0.0
    %225 = vmatpush2.msra.mxu0 %v51
    %226 = vmatprep.subr.mxu0 0.0
    %227 = vmatpush2.msra.mxu0 %v50
    %228 = vmatprep.subr.mxu0 0.0
    %229 = vmatpush2.msra.mxu0 %v49
    %230 = vmatprep.subr.mxu0 0.0
    %231 = vmatpush2.msra.mxu0 %v48
    %232 = vmatprep.subr.mxu0 0.0
    %233 = vmatpush2.msra.mxu0 %v47
    %234 = vmatprep.subr.mxu0 0.0
    %235 = vmatpush2.msra.mxu0 %v46
    %236 = vmatprep.subr.mxu0 0.0
    %237 = vmatpush2.msra.mxu0 %v45
    %238 = vmatprep.subr.mxu0 0.0
    %239 = vmatpush2.msra.mxu0 %v44
    %240 = vmatprep.subr.mxu0 0.0
    %241 = vmatpush2.msra.mxu0 %v43
    %242 = vmatprep.subr.mxu0 0.0
    %243 = vmatpush2.msra.mxu0 %v42
    %244 = vmatprep.subr.mxu0 0.0
    %245 = vmatpush2.msra.mxu0 %v41
    %246 = vmatprep.subr.mxu0 0.0
    %247 = vmatpush2.msra.mxu0 %v40
    %248 = vmatprep.subr.mxu0 0.0
    %249 = vmatpush2.msra.mxu0 %v39
    %250 = vmatprep.subr.mxu0 0.0
    %251 = vmatpush2.msra.mxu0 %v38
    %252 = vmatprep.subr.mxu0 0.0
    %253 = vmatpush2.msra.mxu0 %v37
    %254 = vmatprep.subr.mxu0 0.0
    %255 = vmatpush2.msra.mxu0 %v36
    %256 = vmatprep.mubr.f32.mxu0 %v165
    %257 = vmatmul.mubr.f32.gmra.mxu0 %v157
    %v258 = vpop.f32.mrf.mxu0
    %v259 = vadd.f32 0.0, %v258
    %v260 = vpop.f32.mrf.mxu0
    %261 = vdwg.mxu0
    %262 = vmatprep.subr.mxu0 0.0
    %263 = vmatpush1.msra.mxu0 %v67
    %264 = vmatprep.subr.mxu0 0.0
    %265 = vmatpush1.msra.mxu0 %v66
    %266 = vmatprep.subr.mxu0 0.0
    %267 = vmatpush1.msra.mxu0 %v65
    %268 = vmatprep.subr.mxu0 0.0
    %269 = vmatpush1.msra.mxu0 %v64
    %270 = vmatprep.subr.mxu0 0.0
    %271 = vmatpush1.msra.mxu0 %v63
    %272 = vmatprep.subr.mxu0 0.0
    %273 = vmatpush1.msra.mxu0 %v62
    %274 = vmatprep.subr.mxu0 0.0
    %275 = vmatpush1.msra.mxu0 %v61
    %276 = vmatprep.subr.mxu0 0.0
    %277 = vmatpush1.msra.mxu0 %v60
    %278 = vmatprep.subr.mxu0 0.0
    %279 = vmatpush1.msra.mxu0 %v59
    %280 = vmatprep.subr.mxu0 0.0
    %281 = vmatpush1.msra.mxu0 %v58
    %282 = vmatprep.subr.mxu0 0.0
    %283 = vmatpush1.msra.mxu0 %v57
    %284 = vmatprep.subr.mxu0 0.0
    %285 = vmatpush1.msra.mxu0 %v56
    %286 = vmatprep.subr.mxu0 0.0
    %287 = vmatpush1.msra.mxu0 %v55
    %288 = vmatprep.subr.mxu0 0.0
    %289 = vmatpush1.msra.mxu0 %v54
    %290 = vmatprep.subr.mxu0 0.0
    %291 = vmatpush1.msra.mxu0 %v53
    %292 = vmatprep.subr.mxu0 0.0
    %293 = vmatpush1.msra.mxu0 %v52
    %294 = vmatprep.subr.mxu0 0.0
    %295 = vmatpush2.msra.mxu0 %v83
    %296 = vmatprep.subr.mxu0 0.0
    %297 = vmatpush2.msra.mxu0 %v82
    %298 = vmatprep.subr.mxu0 0.0
    %299 = vmatpush2.msra.mxu0 %v81
    %300 = vmatprep.subr.mxu0 0.0
    %301 = vmatpush2.msra.mxu0 %v80
    %302 = vmatprep.subr.mxu0 0.0
    %303 = vmatpush2.msra.mxu0 %v79
    %304 = vmatprep.subr.mxu0 0.0
    %305 = vmatpush2.msra.mxu0 %v78
    %306 = vmatprep.subr.mxu0 0.0
    %307 = vmatpush2.msra.mxu0 %v77
    %308 = vmatprep.subr.mxu0 0.0
    %309 = vmatpush2.msra.mxu0 %v76
    %310 = vmatprep.subr.mxu0 0.0
    %311 = vmatpush2.msra.mxu0 %v75
    %312 = vmatprep.subr.mxu0 0.0
    %313 = vmatpush2.msra.mxu0 %v74
    %314 = vmatprep.subr.mxu0 0.0
    %315 = vmatpush2.msra.mxu0 %v73
    %316 = vmatprep.subr.mxu0 0.0
    %317 = vmatpush2.msra.mxu0 %v72
    %318 = vmatprep.subr.mxu0 0.0
    %319 = vmatpush2.msra.mxu0 %v71
    %320 = vmatprep.subr.mxu0 0.0
    %321 = vmatpush2.msra.mxu0 %v70
    %322 = vmatprep.subr.mxu0 0.0
    %323 = vmatpush2.msra.mxu0 %v69
    %324 = vmatprep.subr.mxu0 0.0
    %325 = vmatpush2.msra.mxu0 %v68
    %326 = vmatprep.mubr.f32.mxu0 %v166
    %327 = vmatmul.mubr.f32.gmra.mxu0 %v164
    %v328 = vpop.f32.mrf.mxu0
    %v329 = vadd.f32 %v259, %v328
    %v330 = vpop.f32.mrf.mxu0
    %331 = vdwg.mxu0
    %332 = vmatprep.subr.mxu0 0.0
    %333 = vmatpush1.msra.mxu0 %v99
    %334 = vmatprep.subr.mxu0 0.0
    %335 = vmatpush1.msra.mxu0 %v98
    %336 = vmatprep.subr.mxu0 0.0
    %337 = vmatpush1.msra.mxu0 %v97
    %338 = vmatprep.subr.mxu0 0.0
    %339 = vmatpush1.msra.mxu0 %v96
    %340 = vmatprep.subr.mxu0 0.0
    %341 = vmatpush1.msra.mxu0 %v95
    %342 = vmatprep.subr.mxu0 0.0
    %343 = vmatpush1.msra.mxu0 %v94
    %344 = vmatprep.subr.mxu0 0.0
    %345 = vmatpush1.msra.mxu0 %v93
    %346 = vmatprep.subr.mxu0 0.0
    %347 = vmatpush1.msra.mxu0 %v92
    %348 = vmatprep.subr.mxu0 0.0
    %349 = vmatpush1.msra.mxu0 %v91
    %350 = vmatprep.subr.mxu0 0.0
    %351 = vmatpush1.msra.mxu0 %v90
    %352 = vmatprep.subr.mxu0 0.0
    %353 = vmatpush1.msra.mxu0 %v89
    %354 = vmatprep.subr.mxu0 0.0
    %355 = vmatpush1.msra.mxu0 %v88
    %356 = vmatprep.subr.mxu0 0.0
    %357 = vmatpush1.msra.mxu0 %v87
    %358 = vmatprep.subr.mxu0 0.0
    %359 = vmatpush1.msra.mxu0 %v86
    %360 = vmatprep.subr.mxu0 0.0
    %361 = vmatpush1.msra.mxu0 %v85
    %362 = vmatprep.subr.mxu0 0.0
    %363 = vmatpush1.msra.mxu0 %v84
    %364 = vmatprep.subr.mxu0 0.0
    %365 = vmatpush2.msra.mxu0 %v115
    %366 = vmatprep.subr.mxu0 0.0
    %367 = vmatpush2.msra.mxu0 %v114
    %368 = vmatprep.subr.mxu0 0.0
    %369 = vmatpush2.msra.mxu0 %v113
    %370 = vmatprep.subr.mxu0 0.0
    %371 = vmatpush2.msra.mxu0 %v112
    %372 = vmatprep.subr.mxu0 0.0
    %373 = vmatpush2.msra.mxu0 %v111
    %374 = vmatprep.subr.mxu0 0.0
    %375 = vmatpush2.msra.mxu0 %v110
    %376 = vmatprep.subr.mxu0 0.0
    %377 = vmatpush2.msra.mxu0 %v109
    %378 = vmatprep.subr.mxu0 0.0
    %379 = vmatpush2.msra.mxu0 %v108
    %380 = vmatprep.subr.mxu0 0.0
    %381 = vmatpush2.msra.mxu0 %v107
    %382 = vmatprep.subr.mxu0 0.0
    %383 = vmatpush2.msra.mxu0 %v106
    %384 = vmatprep.subr.mxu0 0.0
    %385 = vmatpush2.msra.mxu0 %v105
    %386 = vmatprep.subr.mxu0 0.0
    %387 = vmatpush2.msra.mxu0 %v104
    %388 = vmatprep.subr.mxu0 0.0
    %389 = vmatpush2.msra.mxu0 %v103
    %390 = vmatprep.subr.mxu0 0.0
    %391 = vmatpush2.msra.mxu0 %v102
    %392 = vmatprep.subr.mxu0 0.0
    %393 = vmatpush2.msra.mxu0 %v101
    %394 = vmatprep.subr.mxu0 0.0
    %395 = vmatpush2.msra.mxu0 %v100
    %396 = vmatprep.mubr.f32.mxu0 %v182
    %397 = vmatmul.mubr.f32.gmra.mxu0 %v174
    %v398 = vpop.f32.mrf.mxu0
    %v399 = vadd.f32 %v329, %v398
    %v400 = vpop.f32.mrf.mxu0
    %401 = vdwg.mxu0
    %402 = vmatprep.subr.mxu0 0.0
    %403 = vmatpush1.msra.mxu0 %v131
    %404 = vmatprep.subr.mxu0 0.0
    %405 = vmatpush1.msra.mxu0 %v130
    %406 = vmatprep.subr.mxu0 0.0
    %407 = vmatpush1.msra.mxu0 %v129
    %408 = vmatprep.subr.mxu0 0.0
    %409 = vmatpush1.msra.mxu0 %v128
    %410 = vmatprep.subr.mxu0 0.0
    %411 = vmatpush1.msra.mxu0 %v127
    %412 = vmatprep.subr.mxu0 0.0
    %413 = vmatpush1.msra.mxu0 %v126
    %414 = vmatprep.subr.mxu0 0.0
    %415 = vmatpush1.msra.mxu0 %v125
    %416 = vmatprep.subr.mxu0 0.0
    %417 = vmatpush1.msra.mxu0 %v124
    %418 = vmatprep.subr.mxu0 0.0
    %419 = vmatpush1.msra.mxu0 %v123
    %420 = vmatprep.subr.mxu0 0.0
    %421 = vmatpush1.msra.mxu0 %v122
    %422 = vmatprep.subr.mxu0 0.0
    %423 = vmatpush1.msra.mxu0 %v121
    %424 = vmatprep.subr.mxu0 0.0
    %425 = vmatpush1.msra.mxu0 %v120
    %426 = vmatprep.subr.mxu0 0.0
    %427 = vmatpush1.msra.mxu0 %v119
    %428 = vmatprep.subr.mxu0 0.0
    %429 = vmatpush1.msra.mxu0 %v118
    %430 = vmatprep.subr.mxu0 0.0
    %431 = vmatpush1.msra.mxu0 %v117
    %432 = vmatprep.subr.mxu0 0.0
    %433 = vmatpush1.msra.mxu0 %v116
    %434 = vmatprep.subr.mxu0 0.0
    %435 = vmatpush2.msra.mxu0 %v147
    %436 = vmatprep.subr.mxu0 0.0
    %437 = vmatpush2.msra.mxu0 %v146
    %438 = vmatprep.subr.mxu0 0.0
    %439 = vmatpush2.msra.mxu0 %v145
    %440 = vmatprep.subr.mxu0 0.0
    %441 = vmatpush2.msra.mxu0 %v144
    %442 = vmatprep.subr.mxu0 0.0
    %443 = vmatpush2.msra.mxu0 %v143
    %444 = vmatprep.subr.mxu0 0.0
    %445 = vmatpush2.msra.mxu0 %v142
    %446 = vmatprep.subr.mxu0 0.0
    %447 = vmatpush2.msra.mxu0 %v141
    %448 = vmatprep.subr.mxu0 0.0
    %449 = vmatpush2.msra.mxu0 %v140
    %450 = vmatprep.subr.mxu0 0.0
    %451 = vmatpush2.msra.mxu0 %v139
    %452 = vmatprep.subr.mxu0 0.0
    %453 = vmatpush2.msra.mxu0 %v138
    %454 = vmatprep.subr.mxu0 0.0
    %455 = vmatpush2.msra.mxu0 %v137
    %456 = vmatprep.subr.mxu0 0.0
    %457 = vmatpush2.msra.mxu0 %v136
    %458 = vmatprep.subr.mxu0 0.0
    %459 = vmatpush2.msra.mxu0 %v135
    %460 = vmatprep.subr.mxu0 0.0
    %461 = vmatpush2.msra.mxu0 %v134
    %462 = vmatprep.subr.mxu0 0.0
    %463 = vmatpush2.msra.mxu0 %v133
    %464 = vmatprep.subr.mxu0 0.0
    %465 = vmatpush2.msra.mxu0 %v132
    %466 = vmatprep.mubr.f32.mxu0 %v183
    %467 = vmatmul.mubr.f32.gmra.mxu0 %v181
    %v468 = vpop.f32.mrf.mxu0
    %v469 = vadd.f32 %v399, %v468
    %v470 = vpop.f32.mrf.mxu0
    %471 = vdwg.mxu0
    %v472 = vld [vmem:[%s2] sm:$0x1]
    %v473 = vmul.f32 %v469, 2.0
    %v475 = vlaneseq
    %v476 = vshrl.u32 %v475, 7
    %v477 = vsub.s32 0, %v476
    %v478 = vrot.slane %v472, %v477
    %v480 = vsub.f32 %v478, %v473
    %vm481 = vcmask 254976
    %v482 = vsel %vm481, %v480, inf
    %483 = vmin.xlane.f32.xlu0 %v482
    %v484 = vpop.xlane.xlu0 %483
    %v485 = vlaneseq
    %v486 = vand.u32 %v485, 127
    %vm487 = vcmp.eq.f32.partialorder %v480, %v484
    %v488 = vsel %vm487, %v486, 32
    %v489 = vsel %vm481, %v488, 2147483647
    %v490 = vand.u32 %v489, 65535
    %v491 = vshra.s32 %v489, 16
    %v492 = vcvt.s32.f32 %v490
    %v493 = vcvt.s32.f32 %v491
    %494 = vmin.xlane.f32.xlu0 %v493
    %v495 = vpop.xlane.xlu0 %494
    %vm496 = vcmp.eq.f32.partialorder %v493, %v495
    %v497 = vsel %vm496, %v492, inf
    %498 = vmin.xlane.f32.xlu0 %v497
    %v499 = vpop.xlane.xlu0 %498
    %v500 = vcvt.f32.s32 %v499
    %v501 = vcvt.f32.s32 %v495
    %v502 = vshll.u32 %v501, 16
    %v503 = vadd.s32 %v502, %v500
    %vm504 = vcmp.eq.s32.totalorder %v486, %v503
    %v505 = vsel %vm504, 1, 0
    %v506 = vcvt.s32.f32 %v505
    %v507 = vld [vmem:[%s3] sm:$0xff]
    %v508 = vld [vmem:[%s3 + $0x8] sm:$0xff]
    %v509 = vld [vmem:[%s3 + $0x10] sm:$0xff]
    %v510 = vld [vmem:[%s3 + $0x18] sm:$0xff]
    %v511 = vld [vmem:[%s3 + $0x20] sm:$0xff]
    %v512 = vld [vmem:[%s3 + $0x28] sm:$0xff]
    %v513 = vld [vmem:[%s3 + $0x30] sm:$0xff]
    %v514 = vld [vmem:[%s3 + $0x38] sm:$0xff]
    %v515 = vld [vmem:[%s3 + $0x40] sm:$0xff]
    %v516 = vld [vmem:[%s3 + $0x48] sm:$0xff]
    %v517 = vld [vmem:[%s3 + $0x50] sm:$0xff]
    %v518 = vld [vmem:[%s3 + $0x58] sm:$0xff]
    %v519 = vld [vmem:[%s3 + $0x60] sm:$0xff]
    %v520 = vld [vmem:[%s3 + $0x68] sm:$0xff]
    %v521 = vld [vmem:[%s3 + $0x70] sm:$0xff]
    %v522 = vld [vmem:[%s3 + $0x78] sm:$0xff]
    %v523 = vld [vmem:[%s3 + $0x80] sm:$0xff]
    %v524 = vld [vmem:[%s3 + $0x88] sm:$0xff]
    %v525 = vld [vmem:[%s3 + $0x90] sm:$0xff]
    %v526 = vld [vmem:[%s3 + $0x98] sm:$0xff]
    %v527 = vld [vmem:[%s3 + $0xa0] sm:$0xff]
    %v528 = vld [vmem:[%s3 + $0xa8] sm:$0xff]
    %v529 = vld [vmem:[%s3 + $0xb0] sm:$0xff]
    %v530 = vld [vmem:[%s3 + $0xb8] sm:$0xff]
    %v531 = vld [vmem:[%s3 + $0xc0] sm:$0xff]
    %v532 = vld [vmem:[%s3 + $0xc8] sm:$0xff]
    %v533 = vld [vmem:[%s3 + $0xd0] sm:$0xff]
    %v534 = vld [vmem:[%s3 + $0xd8] sm:$0xff]
    %v535 = vld [vmem:[%s3 + $0xe0] sm:$0xff]
    %v536 = vld [vmem:[%s3 + $0xe8] sm:$0xff]
    %v537 = vld [vmem:[%s3 + $0xf0] sm:$0xff]
    %v538 = vld [vmem:[%s3 + $0xf8] sm:$0xff]
    %v539 = vld [vmem:[%s3 + $0x100] sm:$0xff]
    %v540 = vld [vmem:[%s3 + $0x108] sm:$0xff]
    %v541 = vld [vmem:[%s3 + $0x110] sm:$0xff]
    %v542 = vld [vmem:[%s3 + $0x118] sm:$0xff]
    %vm543 = vcmask 261120
    %v545 = vsel %vm543, %v506, 0
    %547 = vmatprep.subr.mxu0 0.0
    %548 = vmatpush1.msra.mxu0 0.0
    %549 = vmatprep.subr.mxu0 0.0
    %550 = vmatpush1.msra.mxu0 0.0
    %551 = vmatprep.subr.mxu0 0.0
    %552 = vmatpush1.msra.mxu0 0.0
    %553 = vmatprep.subr.mxu0 0.0
    %554 = vmatpush1.msra.mxu0 0.0
    %555 = vmatprep.subr.mxu0 0.0
    %556 = vmatpush1.msra.mxu0 0.0
    %557 = vmatprep.subr.mxu0 0.0
    %558 = vmatpush1.msra.mxu0 0.0
    %559 = vmatprep.subr.mxu0 0.0
    %560 = vmatpush1.msra.mxu0 0.0
    %561 = vmatprep.subr.mxu0 0.0
    %562 = vmatpush1.msra.mxu0 0.0
    %563 = vmatprep.subr.mxu0 0.0
    %564 = vmatpush1.msra.mxu0 0.0
    %565 = vmatprep.subr.mxu0 0.0
    %566 = vmatpush1.msra.mxu0 0.0
    %567 = vmatprep.subr.mxu0 0.0
    %568 = vmatpush1.msra.mxu0 0.0
    %569 = vmatprep.subr.mxu0 0.0
    %570 = vmatpush1.msra.mxu0 0.0
    %571 = vmatprep.subr.mxu0 %v535
    %572 = vmatpush1.msra.mxu0 %v534
    %573 = vmatprep.subr.mxu0 %v526
    %574 = vmatpush1.msra.mxu0 %v525
    %575 = vmatprep.subr.mxu0 %v517
    %576 = vmatpush1.msra.mxu0 %v516
    %577 = vmatprep.subr.mxu0 %v508
    %578 = vmatpush1.msra.mxu0 %v507
    %579 = vmatprep.subr.mxu0 0.0
    %580 = vmatpush2.msra.mxu0 0.0
    %581 = vmatprep.subr.mxu0 0.0
    %582 = vmatpush2.msra.mxu0 0.0
    %583 = vmatprep.subr.mxu0 0.0
    %584 = vmatpush2.msra.mxu0 0.0
    %585 = vmatprep.subr.mxu0 0.0
    %586 = vmatpush2.msra.mxu0 0.0
    %587 = vmatprep.subr.mxu0 0.0
    %588 = vmatpush2.msra.mxu0 0.0
    %589 = vmatprep.subr.mxu0 0.0
    %590 = vmatpush2.msra.mxu0 0.0
    %591 = vmatprep.subr.mxu0 0.0
    %592 = vmatpush2.msra.mxu0 0.0
    %593 = vmatprep.subr.mxu0 0.0
    %594 = vmatpush2.msra.mxu0 0.0
    %595 = vmatprep.subr.mxu0 0.0
    %596 = vmatpush2.msra.mxu0 0.0
    %597 = vmatprep.subr.mxu0 0.0
    %598 = vmatpush2.msra.mxu0 0.0
    %599 = vmatprep.subr.mxu0 0.0
    %600 = vmatpush2.msra.mxu0 0.0
    %601 = vmatprep.subr.mxu0 0.0
    %602 = vmatpush2.msra.mxu0 0.0
    %603 = vmatprep.subr.mxu0 0.0
    %604 = vmatpush2.msra.mxu0 0.0
    %605 = vmatprep.subr.mxu0 0.0
    %606 = vmatpush2.msra.mxu0 0.0
    %607 = vmatprep.subr.mxu0 0.0
    %608 = vmatpush2.msra.mxu0 0.0
    %609 = vmatprep.subr.mxu0 0.0
    %610 = vmatpush2.msra.mxu0 0.0
    %611 = vmatprep.mubr.f32.mxu0 0.0
    %612 = vmatmul.mubr.f32.gmra.mxu0 %v545
    %v613 = vpop.f32.mrf.mxu0
    %v614 = vadd.f32 0.0, %v613
    %v615 = vpop.f32.mrf.mxu0
    %v616 = vadd.f32 0.0, %v615
    %617 = vdwg.mxu0
    %618 = vmatprep.subr.mxu0 0.0
    %619 = vmatpush1.msra.mxu0 0.0
    %620 = vmatprep.subr.mxu0 0.0
    %621 = vmatpush1.msra.mxu0 0.0
    %622 = vmatprep.subr.mxu0 0.0
    %623 = vmatpush1.msra.mxu0 0.0
    %624 = vmatprep.subr.mxu0 0.0
    %625 = vmatpush1.msra.mxu0 0.0
    %626 = vmatprep.subr.mxu0 0.0
    %627 = vmatpush1.msra.mxu0 0.0
    %628 = vmatprep.subr.mxu0 0.0
    %629 = vmatpush1.msra.mxu0 0.0
    %630 = vmatprep.subr.mxu0 0.0
    %631 = vmatpush1.msra.mxu0 0.0
    %632 = vmatprep.subr.mxu0 0.0
    %633 = vmatpush1.msra.mxu0 0.0
    %634 = vmatprep.subr.mxu0 0.0
    %635 = vmatpush1.msra.mxu0 0.0
    %636 = vmatprep.subr.mxu0 0.0
    %637 = vmatpush1.msra.mxu0 0.0
    %638 = vmatprep.subr.mxu0 0.0
    %639 = vmatpush1.msra.mxu0 0.0
    %640 = vmatprep.subr.mxu0 0.0
    %641 = vmatpush1.msra.mxu0 0.0
    %642 = vmatprep.subr.mxu0 %v537
    %643 = vmatpush1.msra.mxu0 %v536
    %644 = vmatprep.subr.mxu0 %v528
    %645 = vmatpush1.msra.mxu0 %v527
    %646 = vmatprep.subr.mxu0 %v519
    %647 = vmatpush1.msra.mxu0 %v518
    %648 = vmatprep.subr.mxu0 %v510
    %649 = vmatpush1.msra.mxu0 %v509
    %650 = vmatprep.subr.mxu0 0.0
    %651 = vmatpush2.msra.mxu0 0.0
    %652 = vmatprep.subr.mxu0 0.0
    %653 = vmatpush2.msra.mxu0 0.0
    %654 = vmatprep.subr.mxu0 0.0
    %655 = vmatpush2.msra.mxu0 0.0
    %656 = vmatprep.subr.mxu0 0.0
    %657 = vmatpush2.msra.mxu0 0.0
    %658 = vmatprep.subr.mxu0 0.0
    %659 = vmatpush2.msra.mxu0 0.0
    %660 = vmatprep.subr.mxu0 0.0
    %661 = vmatpush2.msra.mxu0 0.0
    %662 = vmatprep.subr.mxu0 0.0
    %663 = vmatpush2.msra.mxu0 0.0
    %664 = vmatprep.subr.mxu0 0.0
    %665 = vmatpush2.msra.mxu0 0.0
    %666 = vmatprep.subr.mxu0 0.0
    %667 = vmatpush2.msra.mxu0 0.0
    %668 = vmatprep.subr.mxu0 0.0
    %669 = vmatpush2.msra.mxu0 0.0
    %670 = vmatprep.subr.mxu0 0.0
    %671 = vmatpush2.msra.mxu0 0.0
    %672 = vmatprep.subr.mxu0 0.0
    %673 = vmatpush2.msra.mxu0 0.0
    %674 = vmatprep.subr.mxu0 0.0
    %675 = vmatpush2.msra.mxu0 0.0
    %676 = vmatprep.subr.mxu0 0.0
    %677 = vmatpush2.msra.mxu0 0.0
    %678 = vmatprep.subr.mxu0 0.0
    %679 = vmatpush2.msra.mxu0 0.0
    %680 = vmatprep.subr.mxu0 0.0
    %681 = vmatpush2.msra.mxu0 0.0
    %682 = vmatprep.mubr.f32.mxu0 0.0
    %683 = vmatmul.mubr.f32.gmra.mxu0 %v545
    %v684 = vpop.f32.mrf.mxu0
    %v685 = vadd.f32 0.0, %v684
    %v686 = vpop.f32.mrf.mxu0
    %v687 = vadd.f32 0.0, %v686
    %688 = vdwg.mxu0
    %689 = vmatprep.subr.mxu0 0.0
    %690 = vmatpush1.msra.mxu0 0.0
    %691 = vmatprep.subr.mxu0 0.0
    %692 = vmatpush1.msra.mxu0 0.0
    %693 = vmatprep.subr.mxu0 0.0
    %694 = vmatpush1.msra.mxu0 0.0
    %695 = vmatprep.subr.mxu0 0.0
    %696 = vmatpush1.msra.mxu0 0.0
    %697 = vmatprep.subr.mxu0 0.0
    %698 = vmatpush1.msra.mxu0 0.0
    %699 = vmatprep.subr.mxu0 0.0
    %700 = vmatpush1.msra.mxu0 0.0
    %701 = vmatprep.subr.mxu0 0.0
    %702 = vmatpush1.msra.mxu0 0.0
    %703 = vmatprep.subr.mxu0 0.0
    %704 = vmatpush1.msra.mxu0 0.0
    %705 = vmatprep.subr.mxu0 0.0
    %706 = vmatpush1.msra.mxu0 0.0
    %707 = vmatprep.subr.mxu0 0.0
    %708 = vmatpush1.msra.mxu0 0.0
    %709 = vmatprep.subr.mxu0 0.0
    %710 = vmatpush1.msra.mxu0 0.0
    %711 = vmatprep.subr.mxu0 0.0
    %712 = vmatpush1.msra.mxu0 0.0
    %713 = vmatprep.subr.mxu0 %v539
    %714 = vmatpush1.msra.mxu0 %v538
    %715 = vmatprep.subr.mxu0 %v530
    %716 = vmatpush1.msra.mxu0 %v529
    %717 = vmatprep.subr.mxu0 %v521
    %718 = vmatpush1.msra.mxu0 %v520
    %719 = vmatprep.subr.mxu0 %v512
    %720 = vmatpush1.msra.mxu0 %v511
    %721 = vmatprep.subr.mxu0 0.0
    %722 = vmatpush2.msra.mxu0 0.0
    %723 = vmatprep.subr.mxu0 0.0
    %724 = vmatpush2.msra.mxu0 0.0
    %725 = vmatprep.subr.mxu0 0.0
    %726 = vmatpush2.msra.mxu0 0.0
    %727 = vmatprep.subr.mxu0 0.0
    %728 = vmatpush2.msra.mxu0 0.0
    %729 = vmatprep.subr.mxu0 0.0
    %730 = vmatpush2.msra.mxu0 0.0
    %731 = vmatprep.subr.mxu0 0.0
    %732 = vmatpush2.msra.mxu0 0.0
    %733 = vmatprep.subr.mxu0 0.0
    %734 = vmatpush2.msra.mxu0 0.0
    %735 = vmatprep.subr.mxu0 0.0
    %736 = vmatpush2.msra.mxu0 0.0
    %737 = vmatprep.subr.mxu0 0.0
    %738 = vmatpush2.msra.mxu0 0.0
    %739 = vmatprep.subr.mxu0 0.0
    %740 = vmatpush2.msra.mxu0 0.0
    %741 = vmatprep.subr.mxu0 0.0
    %742 = vmatpush2.msra.mxu0 0.0
    %743 = vmatprep.subr.mxu0 0.0
    %744 = vmatpush2.msra.mxu0 0.0
    %745 = vmatprep.subr.mxu0 0.0
    %746 = vmatpush2.msra.mxu0 0.0
    %747 = vmatprep.subr.mxu0 0.0
    %748 = vmatpush2.msra.mxu0 0.0
    %749 = vmatprep.subr.mxu0 0.0
    %750 = vmatpush2.msra.mxu0 0.0
    %751 = vmatprep.subr.mxu0 0.0
    %752 = vmatpush2.msra.mxu0 0.0
    %753 = vmatprep.mubr.f32.mxu0 0.0
    %754 = vmatmul.mubr.f32.gmra.mxu0 %v545
    %v755 = vpop.f32.mrf.mxu0
    %v756 = vadd.f32 0.0, %v755
    %v757 = vpop.f32.mrf.mxu0
    %v758 = vadd.f32 0.0, %v757
    %759 = vdwg.mxu0
    %760 = vmatprep.subr.mxu0 0.0
    %761 = vmatpush1.msra.mxu0 0.0
    %762 = vmatprep.subr.mxu0 0.0
    %763 = vmatpush1.msra.mxu0 0.0
    %764 = vmatprep.subr.mxu0 0.0
    %765 = vmatpush1.msra.mxu0 0.0
    %766 = vmatprep.subr.mxu0 0.0
    %767 = vmatpush1.msra.mxu0 0.0
    %768 = vmatprep.subr.mxu0 0.0
    %769 = vmatpush1.msra.mxu0 0.0
    %770 = vmatprep.subr.mxu0 0.0
    %771 = vmatpush1.msra.mxu0 0.0
    %772 = vmatprep.subr.mxu0 0.0
    %773 = vmatpush1.msra.mxu0 0.0
    %774 = vmatprep.subr.mxu0 0.0
    %775 = vmatpush1.msra.mxu0 0.0
    %776 = vmatprep.subr.mxu0 0.0
    %777 = vmatpush1.msra.mxu0 0.0
    %778 = vmatprep.subr.mxu0 0.0
    %779 = vmatpush1.msra.mxu0 0.0
    %780 = vmatprep.subr.mxu0 0.0
    %781 = vmatpush1.msra.mxu0 0.0
    %782 = vmatprep.subr.mxu0 0.0
    %783 = vmatpush1.msra.mxu0 0.0
    %784 = vmatprep.subr.mxu0 %v541
    %785 = vmatpush1.msra.mxu0 %v540
    %786 = vmatprep.subr.mxu0 %v532
    %787 = vmatpush1.msra.mxu0 %v531
    %788 = vmatprep.subr.mxu0 %v523
    %789 = vmatpush1.msra.mxu0 %v522
    %790 = vmatprep.subr.mxu0 %v514
    %791 = vmatpush1.msra.mxu0 %v513
    %792 = vmatprep.subr.mxu0 0.0
    %793 = vmatpush2.msra.mxu0 0.0
    %794 = vmatprep.subr.mxu0 0.0
    %795 = vmatpush2.msra.mxu0 0.0
    %796 = vmatprep.subr.mxu0 0.0
    %797 = vmatpush2.msra.mxu0 0.0
    %798 = vmatprep.subr.mxu0 0.0
    %799 = vmatpush2.msra.mxu0 0.0
    %800 = vmatprep.subr.mxu0 0.0
    %801 = vmatpush2.msra.mxu0 0.0
    %802 = vmatprep.subr.mxu0 0.0
    %803 = vmatpush2.msra.mxu0 0.0
    %804 = vmatprep.subr.mxu0 0.0
    %805 = vmatpush2.msra.mxu0 0.0
    %806 = vmatprep.subr.mxu0 0.0
    %807 = vmatpush2.msra.mxu0 0.0
    %808 = vmatprep.subr.mxu0 0.0
    %809 = vmatpush2.msra.mxu0 0.0
    %810 = vmatprep.subr.mxu0 0.0
    %811 = vmatpush2.msra.mxu0 0.0
    %812 = vmatprep.subr.mxu0 0.0
    %813 = vmatpush2.msra.mxu0 0.0
    %814 = vmatprep.subr.mxu0 0.0
    %815 = vmatpush2.msra.mxu0 0.0
    %816 = vmatprep.subr.mxu0 0.0
    %817 = vmatpush2.msra.mxu0 0.0
    %818 = vmatprep.subr.mxu0 0.0
    %819 = vmatpush2.msra.mxu0 0.0
    %820 = vmatprep.subr.mxu0 0.0
    %821 = vmatpush2.msra.mxu0 0.0
    %822 = vmatprep.subr.mxu0 0.0
    %823 = vmatpush2.msra.mxu0 0.0
    %824 = vmatprep.mubr.f32.mxu0 0.0
    %825 = vmatmul.mubr.f32.gmra.mxu0 %v545
    %v826 = vpop.f32.mrf.mxu0
    %v827 = vadd.f32 0.0, %v826
    %v828 = vpop.f32.mrf.mxu0
    %v829 = vadd.f32 0.0, %v828
    %830 = vdwg.mxu0
    %831 = vmatprep.subr.mxu0 0.0
    %832 = vmatpush1.msra.mxu0 0.0
    %833 = vmatprep.subr.mxu0 0.0
    %834 = vmatpush1.msra.mxu0 0.0
    %835 = vmatprep.subr.mxu0 0.0
    %836 = vmatpush1.msra.mxu0 0.0
    %837 = vmatprep.subr.mxu0 0.0
    %838 = vmatpush1.msra.mxu0 0.0
    %839 = vmatprep.subr.mxu0 0.0
    %840 = vmatpush1.msra.mxu0 0.0
    %841 = vmatprep.subr.mxu0 0.0
    %842 = vmatpush1.msra.mxu0 0.0
    %843 = vmatprep.subr.mxu0 0.0
    %844 = vmatpush1.msra.mxu0 0.0
    %845 = vmatprep.subr.mxu0 0.0
    %846 = vmatpush1.msra.mxu0 0.0
    %847 = vmatprep.subr.mxu0 0.0
    %848 = vmatpush1.msra.mxu0 0.0
    %849 = vmatprep.subr.mxu0 0.0
    %850 = vmatpush1.msra.mxu0 0.0
    %851 = vmatprep.subr.mxu0 0.0
    %852 = vmatpush1.msra.mxu0 0.0
    %853 = vmatprep.subr.mxu0 0.0
    %854 = vmatpush1.msra.mxu0 0.0
    %855 = vmatprep.subr.mxu0 0.0
    %856 = vmatpush1.msra.mxu0 %v542
    %857 = vmatprep.subr.mxu0 0.0
    %858 = vmatpush1.msra.mxu0 %v533
    %859 = vmatprep.subr.mxu0 0.0
    %860 = vmatpush1.msra.mxu0 %v524
    %861 = vmatprep.subr.mxu0 0.0
    %862 = vmatpush1.msra.mxu0 %v515
    %863 = vmatprep.subr.mxu0 0.0
    %864 = vmatpush2.msra.mxu0 0.0
    %865 = vmatprep.subr.mxu0 0.0
    %866 = vmatpush2.msra.mxu0 0.0
    %867 = vmatprep.subr.mxu0 0.0
    %868 = vmatpush2.msra.mxu0 0.0
    %869 = vmatprep.subr.mxu0 0.0
    %870 = vmatpush2.msra.mxu0 0.0
    %871 = vmatprep.subr.mxu0 0.0
    %872 = vmatpush2.msra.mxu0 0.0
    %873 = vmatprep.subr.mxu0 0.0
    %874 = vmatpush2.msra.mxu0 0.0
    %875 = vmatprep.subr.mxu0 0.0
    %876 = vmatpush2.msra.mxu0 0.0
    %877 = vmatprep.subr.mxu0 0.0
    %878 = vmatpush2.msra.mxu0 0.0
    %879 = vmatprep.subr.mxu0 0.0
    %880 = vmatpush2.msra.mxu0 0.0
    %881 = vmatprep.subr.mxu0 0.0
    %882 = vmatpush2.msra.mxu0 0.0
    %883 = vmatprep.subr.mxu0 0.0
    %884 = vmatpush2.msra.mxu0 0.0
    %885 = vmatprep.subr.mxu0 0.0
    %886 = vmatpush2.msra.mxu0 0.0
    %887 = vmatprep.subr.mxu0 0.0
    %888 = vmatpush2.msra.mxu0 0.0
    %889 = vmatprep.subr.mxu0 0.0
    %890 = vmatpush2.msra.mxu0 0.0
    %891 = vmatprep.subr.mxu0 0.0
    %892 = vmatpush2.msra.mxu0 0.0
    %893 = vmatprep.subr.mxu0 0.0
    %894 = vmatpush2.msra.mxu0 0.0
    %895 = vmatprep.mubr.f32.mxu0 0.0
    %896 = vmatmul.mubr.f32.gmra.mxu0 %v545
    %v897 = vpop.f32.mrf.mxu0
    %v898 = vadd.f32 0.0, %v897
    %v899 = vpop.f32.mrf.mxu0
    %900 = vdwg.mxu0
    %v910 = vcombine.low %v614, %v616
    %v911 = vcombine.low %v685, %v687
    %v913 = vunpack.c.l.s4 1983009808
    %v914 = vunpack.c.0.s8 %v913
    %v915 = vlaneseq
    %v916 = vshrl.u32 %v915, 7
    %v917 = vsub.s32 %v914, %v916
    %v918 = vrot.slane %v910, %v917
    %v920 = vunpack.c.l.s4 1983009808
    %v921 = vunpack.c.0.s8 %v920
    %v922 = vlaneseq
    %v923 = vshrl.u32 %v922, 7
    %v924 = vsub.s32 %v921, %v923
    %v925 = vrot.slane %v911, %v924
    %v926 = vcombine.low %v918, %v925
    %v927 = vcombine.low %v756, %v758
    %v928 = vcombine.low %v827, %v829
    %v930 = vunpack.c.l.s4 1983009808
    %v931 = vunpack.c.0.s8 %v930
    %v932 = vlaneseq
    %v933 = vshrl.u32 %v932, 7
    %v934 = vsub.s32 %v931, %v933
    %v935 = vrot.slane %v927, %v934
    %v937 = vunpack.c.l.s4 1983009808
    %v938 = vunpack.c.0.s8 %v937
    %v939 = vlaneseq
    %v940 = vshrl.u32 %v939, 7
    %v941 = vsub.s32 %v938, %v940
    %v942 = vrot.slane %v928, %v941
    %v943 = vcombine.low %v935, %v942
    %v945 = vunpack.c.l.s4 1983009808
    %v946 = vunpack.c.0.s8 %v945
    %v947 = vlaneseq
    %v948 = vshrl.u32 %v947, 7
    %v949 = vsub.s32 %v946, %v948
    %v950 = vrot.slane %v898, %v949
    %954 = vst [vmem:[#allocation2] sm:$0xff] %v926
    %955 = vst [vmem:[#allocation2 + $0x8] sm:$0xff] %v943
    %956 = vst [vmem:[#allocation2 + $0x10] sm:$0x3] %v950
    // Predicated region
    $region18: #{tpu_custom_call.1} parent=1 // pred_check
      _
    $region19: #{tpu_custom_call.1} parent=1 // pred_check_branch
      %958 = sbr.rel (0) target = $region21
    $region20: #{tpu_custom_call.1} parent=1 // pred_region
      %s960 = ssub.s32 288, 288
      %961 = vsyncadd [#allocation3], %s960
      %s963 = sshll.u32 [#allocation2], 4
      %s964 = int_to_ptr.vmem [resolvable:$true] %s963
      %966 = dma.vmem_to_hbm [thread:$0]  %s964, 288, %s4, [#allocation3]
    $region21: #{tpu_custom_call.1} parent=1 // pred_fallthru
      _
    // Predicated region
    $region22: #{tpu_custom_call.1} parent=1 // pred_check
      _
    $region23: #{tpu_custom_call.1} parent=1 // pred_check_branch
      %968 = sbr.rel (0) target = $region25
    $region24: #{tpu_custom_call.1} parent=1 // pred_region
      %969 = dma.done [#allocation3], 288
    $region25: #{tpu_custom_call.1} parent=1 // pred_fallthru
      _
    %970 = vsyncpa [#allocation3], 1

// kernel: tpu_custom_call.1
$region0: #{tpu_custom_call.1}
  #allocation0 [shape = 'u32[]', space=smem, size = 0x4, offset = 0x4, fixed_abs, tag = 'smem constant byte address 0x4 - core index']
  #allocation1 [shape = 'u32[144,128]{1,0:T(1,128)}', space=vmem, size = 0x12000, scoped, tag = 'internal scratch']
  %s0 = inlined_call_operand.vmem [shape: f32[2,1024], index: 0, kind: input, shape index: {}]
  %s1 = inlined_call_operand.vmem [shape: f32[1024,32], index: 1, kind: input, shape index: {}]
  %s2 = inlined_call_operand.vmem [shape: f32[1,32], index: 2, kind: input, shape index: {}]
  %s3 = inlined_call_operand.vmem [shape: f32[32,1152], index: 3, kind: input, shape index: {}]
  %s4 = inlined_call_operand.hbm [shape: f32[2,1152], index: 4, kind: output, shape index: {}]
  %s5 = sld [smem:[#allocation0]]
  $region26: #{tpu_custom_call.1} parent=0
    _
  %s7 = ssub.s32 1, %s5
  %s8 = scalar_select 0, %s7, %s5
  $region1: #{tpu_custom_call.1} parent=0
    #allocation2 [shape = 'u8[9216]{0}', space=vmem, size = 0x2400, scoped, tag = 'output window, operand 0, single buffered']
    #allocation3 [shape = 's32[1]{0}', space=sflag, size = 0x4, scoped, tag = 'scoped memory for tpu_custom_call.1']
    %9 = vsyncpa [#allocation3], 0
    // Predicated region
    $region2: #{tpu_custom_call.1} parent=1 // pred_check
      _
    $region3: #{tpu_custom_call.1} parent=1 // pred_check_branch
      %11 = sbr.rel (0) target = $region5
    $region4: #{tpu_custom_call.1} parent=1 // pred_region
      _
    $region5: #{tpu_custom_call.1} parent=1 // pred_fallthru
      _
    // Predicated region
    $region6: #{tpu_custom_call.1} parent=1 // pred_check
      _
    $region7: #{tpu_custom_call.1} parent=1 // pred_check_branch
      %13 = sbr.rel (0) target = $region9
    $region8: #{tpu_custom_call.1} parent=1 // pred_region
      _
    $region9: #{tpu_custom_call.1} parent=1 // pred_fallthru
      _
    // Predicated region
    $region10: #{tpu_custom_call.1} parent=1 // pred_check
      _
    $region11: #{tpu_custom_call.1} parent=1 // pred_check_branch
      %15 = sbr.rel (0) target = $region13
    $region12: #{tpu_custom_call.1} parent=1 // pred_region
      _
    $region13: #{tpu_custom_call.1} parent=1 // pred_fallthru
      _
    // Predicated region
    $region14: #{tpu_custom_call.1} parent=1 // pred_check
      _
    $region15: #{tpu_custom_call.1} parent=1 // pred_check_branch
      %17 = sbr.rel (0) target = $region17
    $region16: #{tpu_custom_call.1} parent=1 // pred_region
      _
    $region17: #{tpu_custom_call.1} parent=1 // pred_fallthru
      _
    %v18 = vld [vmem:[%s0] sm:$0xff]
    %v19 = vld [vmem:[%s0 + $0x8] sm:$0xff]
    %v20 = vld [vmem:[%s1] sm:$0xff]
    %v21 = vld [vmem:[%s1 + $0x8] sm:$0xff]
    %v22 = vld [vmem:[%s1 + $0x10] sm:$0xff]
    %v23 = vld [vmem:[%s1 + $0x18] sm:$0xff]
    %v24 = vld [vmem:[%s1 + $0x20] sm:$0xff]
    %v25 = vld [vmem:[%s1 + $0x28] sm:$0xff]
    %v26 = vld [vmem:[%s1 + $0x30] sm:$0xff]
    %v27 = vld [vmem:[%s1 + $0x38] sm:$0xff]
    %v28 = vld [vmem:[%s1 + $0x40] sm:$0xff]
    %v29 = vld [vmem:[%s1 + $0x48] sm:$0xff]
    %v30 = vld [vmem:[%s1 + $0x50] sm:$0xff]
    %v31 = vld [vmem:[%s1 + $0x58] sm:$0xff]
    %v32 = vld [vmem:[%s1 + $0x60] sm:$0xff]
    %v33 = vld [vmem:[%s1 + $0x68] sm:$0xff]
    %v34 = vld [vmem:[%s1 + $0x70] sm:$0xff]
    %v35 = vld [vmem:[%s1 + $0x78] sm:$0xff]
    %v36 = vld [vmem:[%s1 + $0x80] sm:$0xff]
    %v37 = vld [vmem:[%s1 + $0x88] sm:$0xff]
    %v38 = vld [vmem:[%s1 + $0x90] sm:$0xff]
    %v39 = vld [vmem:[%s1 + $0x98] sm:$0xff]
    %v40 = vld [vmem:[%s1 + $0xa0] sm:$0xff]
    %v41 = vld [vmem:[%s1 + $0xa8] sm:$0xff]
    %v42 = vld [vmem:[%s1 + $0xb0] sm:$0xff]
    %v43 = vld [vmem:[%s1 + $0xb8] sm:$0xff]
    %v44 = vld [vmem:[%s1 + $0xc0] sm:$0xff]
    %v45 = vld [vmem:[%s1 + $0xc8] sm:$0xff]
    %v46 = vld [vmem:[%s1 + $0xd0] sm:$0xff]
    %v47 = vld [vmem:[%s1 + $0xd8] sm:$0xff]
    %v48 = vld [vmem:[%s1 + $0xe0] sm:$0xff]
    %v49 = vld [vmem:[%s1 + $0xe8] sm:$0xff]
    %v50 = vld [vmem:[%s1 + $0xf0] sm:$0xff]
    %v51 = vld [vmem:[%s1 + $0xf8] sm:$0xff]
    %v52 = vld [vmem:[%s1 + $0x100] sm:$0xff]
    %v53 = vld [vmem:[%s1 + $0x108] sm:$0xff]
    %v54 = vld [vmem:[%s1 + $0x110] sm:$0xff]
    %v55 = vld [vmem:[%s1 + $0x118] sm:$0xff]
    %v56 = vld [vmem:[%s1 + $0x120] sm:$0xff]
    %v57 = vld [vmem:[%s1 + $0x128] sm:$0xff]
    %v58 = vld [vmem:[%s1 + $0x130] sm:$0xff]
    %v59 = vld [vmem:[%s1 + $0x138] sm:$0xff]
    %v60 = vld [vmem:[%s1 + $0x140] sm:$0xff]
    %v61 = vld [vmem:[%s1 + $0x148] sm:$0xff]
    %v62 = vld [vmem:[%s1 + $0x150] sm:$0xff]
    %v63 = vld [vmem:[%s1 + $0x158] sm:$0xff]
    %v64 = vld [vmem:[%s1 + $0x160] sm:$0xff]
    %v65 = vld [vmem:[%s1 + $0x168] sm:$0xff]
    %v66 = vld [vmem:[%s1 + $0x170] sm:$0xff]
    %v67 = vld [vmem:[%s1 + $0x178] sm:$0xff]
    %v68 = vld [vmem:[%s1 + $0x180] sm:$0xff]
    %v69 = vld [vmem:[%s1 + $0x188] sm:$0xff]
    %v70 = vld [vmem:[%s1 + $0x190] sm:$0xff]
    %v71 = vld [vmem:[%s1 + $0x198] sm:$0xff]
    %v72 = vld [vmem:[%s1 + $0x1a0] sm:$0xff]
    %v73 = vld [vmem:[%s1 + $0x1a8] sm:$0xff]
    %v74 = vld [vmem:[%s1 + $0x1b0] sm:$0xff]
    %v75 = vld [vmem:[%s1 + $0x1b8] sm:$0xff]
    %v76 = vld [vmem:[%s1 + $0x1c0] sm:$0xff]
    %v77 = vld [vmem:[%s1 + $0x1c8] sm:$0xff]
    %v78 = vld [vmem:[%s1 + $0x1d0] sm:$0xff]
    %v79 = vld [vmem:[%s1 + $0x1d8] sm:$0xff]
    %v80 = vld [vmem:[%s1 + $0x1e0] sm:$0xff]
    %v81 = vld [vmem:[%s1 + $0x1e8] sm:$0xff]
    %v82 = vld [vmem:[%s1 + $0x1f0] sm:$0xff]
    %v83 = vld [vmem:[%s1 + $0x1f8] sm:$0xff]
    %v84 = vld [vmem:[%s1 + $0x200] sm:$0xff]
    %v85 = vld [vmem:[%s1 + $0x208] sm:$0xff]
    %v86 = vld [vmem:[%s1 + $0x210] sm:$0xff]
    %v87 = vld [vmem:[%s1 + $0x218] sm:$0xff]
    %v88 = vld [vmem:[%s1 + $0x220] sm:$0xff]
    %v89 = vld [vmem:[%s1 + $0x228] sm:$0xff]
    %v90 = vld [vmem:[%s1 + $0x230] sm:$0xff]
    %v91 = vld [vmem:[%s1 + $0x238] sm:$0xff]
    %v92 = vld [vmem:[%s1 + $0x240] sm:$0xff]
    %v93 = vld [vmem:[%s1 + $0x248] sm:$0xff]
    %v94 = vld [vmem:[%s1 + $0x250] sm:$0xff]
    %v95 = vld [vmem:[%s1 + $0x258] sm:$0xff]
    %v96 = vld [vmem:[%s1 + $0x260] sm:$0xff]
    %v97 = vld [vmem:[%s1 + $0x268] sm:$0xff]
    %v98 = vld [vmem:[%s1 + $0x270] sm:$0xff]
    %v99 = vld [vmem:[%s1 + $0x278] sm:$0xff]
    %v100 = vld [vmem:[%s1 + $0x280] sm:$0xff]
    %v101 = vld [vmem:[%s1 + $0x288] sm:$0xff]
    %v102 = vld [vmem:[%s1 + $0x290] sm:$0xff]
    %v103 = vld [vmem:[%s1 + $0x298] sm:$0xff]
    %v104 = vld [vmem:[%s1 + $0x2a0] sm:$0xff]
    %v105 = vld [vmem:[%s1 + $0x2a8] sm:$0xff]
    %v106 = vld [vmem:[%s1 + $0x2b0] sm:$0xff]
    %v107 = vld [vmem:[%s1 + $0x2b8] sm:$0xff]
    %v108 = vld [vmem:[%s1 + $0x2c0] sm:$0xff]
    %v109 = vld [vmem:[%s1 + $0x2c8] sm:$0xff]
    %v110 = vld [vmem:[%s1 + $0x2d0] sm:$0xff]
    %v111 = vld [vmem:[%s1 + $0x2d8] sm:$0xff]
    %v112 = vld [vmem:[%s1 + $0x2e0] sm:$0xff]
    %v113 = vld [vmem:[%s1 + $0x2e8] sm:$0xff]
    %v114 = vld [vmem:[%s1 + $0x2f0] sm:$0xff]
    %v115 = vld [vmem:[%s1 + $0x2f8] sm:$0xff]
    %v116 = vld [vmem:[%s1 + $0x300] sm:$0xff]
    %v117 = vld [vmem:[%s1 + $0x308] sm:$0xff]
    %v118 = vld [vmem:[%s1 + $0x310] sm:$0xff]
    %v119 = vld [vmem:[%s1 + $0x318] sm:$0xff]
    %v120 = vld [vmem:[%s1 + $0x320] sm:$0xff]
    %v121 = vld [vmem:[%s1 + $0x328] sm:$0xff]
    %v122 = vld [vmem:[%s1 + $0x330] sm:$0xff]
    %v123 = vld [vmem:[%s1 + $0x338] sm:$0xff]
    %v124 = vld [vmem:[%s1 + $0x340] sm:$0xff]
    %v125 = vld [vmem:[%s1 + $0x348] sm:$0xff]
    %v126 = vld [vmem:[%s1 + $0x350] sm:$0xff]
    %v127 = vld [vmem:[%s1 + $0x358] sm:$0xff]
    %v128 = vld [vmem:[%s1 + $0x360] sm:$0xff]
    %v129 = vld [vmem:[%s1 + $0x368] sm:$0xff]
    %v130 = vld [vmem:[%s1 + $0x370] sm:$0xff]
    %v131 = vld [vmem:[%s1 + $0x378] sm:$0xff]
    %v132 = vld [vmem:[%s1 + $0x380] sm:$0xff]
    %v133 = vld [vmem:[%s1 + $0x388] sm:$0xff]
    %v134 = vld [vmem:[%s1 + $0x390] sm:$0xff]
    %v135 = vld [vmem:[%s1 + $0x398] sm:$0xff]
    %v136 = vld [vmem:[%s1 + $0x3a0] sm:$0xff]
    %v137 = vld [vmem:[%s1 + $0x3a8] sm:$0xff]
    %v138 = vld [vmem:[%s1 + $0x3b0] sm:$0xff]
    %v139 = vld [vmem:[%s1 + $0x3b8] sm:$0xff]
    %v140 = vld [vmem:[%s1 + $0x3c0] sm:$0xff]
    %v141 = vld [vmem:[%s1 + $0x3c8] sm:$0xff]
    %v142 = vld [vmem:[%s1 + $0x3d0] sm:$0xff]
    %v143 = vld [vmem:[%s1 + $0x3d8] sm:$0xff]
    %v144 = vld [vmem:[%s1 + $0x3e0] sm:$0xff]
    %v145 = vld [vmem:[%s1 + $0x3e8] sm:$0xff]
    %v146 = vld [vmem:[%s1 + $0x3f0] sm:$0xff]
    %v147 = vld [vmem:[%s1 + $0x3f8] sm:$0xff]
    %v150 = vcombine.high %v18, %v18
    %v152 = vunpack.c.l.s4 1983009808
    %v153 = vunpack.c.0.s8 %v152
    %v154 = vlaneseq
    %v155 = vshrl.u32 %v154, 7
    %v156 = vsub.s32 %v153, %v155
    %v157 = vrot.slane %v18, %v156
    %v159 = vunpack.c.l.s4 1983009808
    %v160 = vunpack.c.0.s8 %v159
    %v161 = vlaneseq
    %v162 = vshrl.u32 %v161, 7
    %v163 = vsub.s32 %v160, %v162
    %v164 = vrot.slane %v150, %v163
    %v165 = vcombine.high %v157, %v157
    %v166 = vcombine.high %v164, %v164
    %v167 = vcombine.high %v19, %v19
    %v169 = vunpack.c.l.s4 1983009808
    %v170 = vunpack.c.0.s8 %v169
    %v171 = vlaneseq
    %v172 = vshrl.u32 %v171, 7
    %v173 = vsub.s32 %v170, %v172
    %v174 = vrot.slane %v19, %v173
    %v176 = vunpack.c.l.s4 1983009808
    %v177 = vunpack.c.0.s8 %v176
    %v178 = vlaneseq
    %v179 = vshrl.u32 %v178, 7
    %v180 = vsub.s32 %v177, %v179
    %v181 = vrot.slane %v167, %v180
    %v182 = vcombine.high %v174, %v174
    %v183 = vcombine.high %v181, %v181
    %192 = vmatprep.subr.mxu0 0.0
    %193 = vmatpush1.msra.mxu0 %v35
    %194 = vmatprep.subr.mxu0 0.0
    %195 = vmatpush1.msra.mxu0 %v34
    %196 = vmatprep.subr.mxu0 0.0
    %197 = vmatpush1.msra.mxu0 %v33
    %198 = vmatprep.subr.mxu0 0.0
    %199 = vmatpush1.msra.mxu0 %v32
    %200 = vmatprep.subr.mxu0 0.0
    %201 = vmatpush1.msra.mxu0 %v31
    %202 = vmatprep.subr.mxu0 0.0
    %203 = vmatpush1.msra.mxu0 %v30
    %204 = vmatprep.subr.mxu0 0.0
    %205 = vmatpush1.msra.mxu0 %v29
    %206 = vmatprep.subr.mxu0 0.0
    %207 = vmatpush1.msra.mxu0 %v28
    %208 = vmatprep.subr.mxu0 0.0
    %209 = vmatpush1.msra.mxu0 %v27
    %210 = vmatprep.subr.mxu0 0.0
    %211 = vmatpush1.msra.mxu0 %v26
    %212 = vmatprep.subr.mxu0 0.0
    %213 = vmatpush1.msra.mxu0 %v25
    %214 = vmatprep.subr.mxu0 0.0
    %215 = vmatpush1.msra.mxu0 %v24
    %216 = vmatprep.subr.mxu0 0.0
    %217 = vmatpush1.msra.mxu0 %v23
    %218 = vmatprep.subr.mxu0 0.0
    %219 = vmatpush1.msra.mxu0 %v22
    %220 = vmatprep.subr.mxu0 0.0
    %221 = vmatpush1.msra.mxu0 %v21
    %222 = vmatprep.subr.mxu0 0.0
    %223 = vmatpush1.msra.mxu0 %v20
    %224 = vmatprep.subr.mxu0 0.0
    %225 = vmatpush2.msra.mxu0 %v51
    %226 = vmatprep.subr.mxu0 0.0
    %227 = vmatpush2.msra.mxu0 %v50
    %228 = vmatprep.subr.mxu0 0.0
    %229 = vmatpush2.msra.mxu0 %v49
    %230 = vmatprep.subr.mxu0 0.0
    %231 = vmatpush2.msra.mxu0 %v48
    %232 = vmatprep.subr.mxu0 0.0
    %233 = vmatpush2.msra.mxu0 %v47
    %234 = vmatprep.subr.mxu0 0.0
    %235 = vmatpush2.msra.mxu0 %v46
    %236 = vmatprep.subr.mxu0 0.0
    %237 = vmatpush2.msra.mxu0 %v45
    %238 = vmatprep.subr.mxu0 0.0
    %239 = vmatpush2.msra.mxu0 %v44
    %240 = vmatprep.subr.mxu0 0.0
    %241 = vmatpush2.msra.mxu0 %v43
    %242 = vmatprep.subr.mxu0 0.0
    %243 = vmatpush2.msra.mxu0 %v42
    %244 = vmatprep.subr.mxu0 0.0
    %245 = vmatpush2.msra.mxu0 %v41
    %246 = vmatprep.subr.mxu0 0.0
    %247 = vmatpush2.msra.mxu0 %v40
    %248 = vmatprep.subr.mxu0 0.0
    %249 = vmatpush2.msra.mxu0 %v39
    %250 = vmatprep.subr.mxu0 0.0
    %251 = vmatpush2.msra.mxu0 %v38
    %252 = vmatprep.subr.mxu0 0.0
    %253 = vmatpush2.msra.mxu0 %v37
    %254 = vmatprep.subr.mxu0 0.0
    %255 = vmatpush2.msra.mxu0 %v36
    %256 = vmatprep.mubr.f32.mxu0 %v165
    %257 = vmatmul.mubr.f32.gmra.mxu0 %v157
    %v258 = vpop.f32.mrf.mxu0
    %v259 = vadd.f32 0.0, %v258
    %v260 = vpop.f32.mrf.mxu0
    %261 = vdwg.mxu0
    %262 = vmatprep.subr.mxu0 0.0
    %263 = vmatpush1.msra.mxu0 %v67
    %264 = vmatprep.subr.mxu0 0.0
    %265 = vmatpush1.msra.mxu0 %v66
    %266 = vmatprep.subr.mxu0 0.0
    %267 = vmatpush1.msra.mxu0 %v65
    %268 = vmatprep.subr.mxu0 0.0
    %269 = vmatpush1.msra.mxu0 %v64
    %270 = vmatprep.subr.mxu0 0.0
    %271 = vmatpush1.msra.mxu0 %v63
    %272 = vmatprep.subr.mxu0 0.0
    %273 = vmatpush1.msra.mxu0 %v62
    %274 = vmatprep.subr.mxu0 0.0
    %275 = vmatpush1.msra.mxu0 %v61
    %276 = vmatprep.subr.mxu0 0.0
    %277 = vmatpush1.msra.mxu0 %v60
    %278 = vmatprep.subr.mxu0 0.0
    %279 = vmatpush1.msra.mxu0 %v59
    %280 = vmatprep.subr.mxu0 0.0
    %281 = vmatpush1.msra.mxu0 %v58
    %282 = vmatprep.subr.mxu0 0.0
    %283 = vmatpush1.msra.mxu0 %v57
    %284 = vmatprep.subr.mxu0 0.0
    %285 = vmatpush1.msra.mxu0 %v56
    %286 = vmatprep.subr.mxu0 0.0
    %287 = vmatpush1.msra.mxu0 %v55
    %288 = vmatprep.subr.mxu0 0.0
    %289 = vmatpush1.msra.mxu0 %v54
    %290 = vmatprep.subr.mxu0 0.0
    %291 = vmatpush1.msra.mxu0 %v53
    %292 = vmatprep.subr.mxu0 0.0
    %293 = vmatpush1.msra.mxu0 %v52
    %294 = vmatprep.subr.mxu0 0.0
    %295 = vmatpush2.msra.mxu0 %v83
    %296 = vmatprep.subr.mxu0 0.0
    %297 = vmatpush2.msra.mxu0 %v82
    %298 = vmatprep.subr.mxu0 0.0
    %299 = vmatpush2.msra.mxu0 %v81
    %300 = vmatprep.subr.mxu0 0.0
    %301 = vmatpush2.msra.mxu0 %v80
    %302 = vmatprep.subr.mxu0 0.0
    %303 = vmatpush2.msra.mxu0 %v79
    %304 = vmatprep.subr.mxu0 0.0
    %305 = vmatpush2.msra.mxu0 %v78
    %306 = vmatprep.subr.mxu0 0.0
    %307 = vmatpush2.msra.mxu0 %v77
    %308 = vmatprep.subr.mxu0 0.0
    %309 = vmatpush2.msra.mxu0 %v76
    %310 = vmatprep.subr.mxu0 0.0
    %311 = vmatpush2.msra.mxu0 %v75
    %312 = vmatprep.subr.mxu0 0.0
    %313 = vmatpush2.msra.mxu0 %v74
    %314 = vmatprep.subr.mxu0 0.0
    %315 = vmatpush2.msra.mxu0 %v73
    %316 = vmatprep.subr.mxu0 0.0
    %317 = vmatpush2.msra.mxu0 %v72
    %318 = vmatprep.subr.mxu0 0.0
    %319 = vmatpush2.msra.mxu0 %v71
    %320 = vmatprep.subr.mxu0 0.0
    %321 = vmatpush2.msra.mxu0 %v70
    %322 = vmatprep.subr.mxu0 0.0
    %323 = vmatpush2.msra.mxu0 %v69
    %324 = vmatprep.subr.mxu0 0.0
    %325 = vmatpush2.msra.mxu0 %v68
    %326 = vmatprep.mubr.f32.mxu0 %v166
    %327 = vmatmul.mubr.f32.gmra.mxu0 %v164
    %v328 = vpop.f32.mrf.mxu0
    %v329 = vadd.f32 %v259, %v328
    %v330 = vpop.f32.mrf.mxu0
    %331 = vdwg.mxu0
    %332 = vmatprep.subr.mxu0 0.0
    %333 = vmatpush1.msra.mxu0 %v99
    %334 = vmatprep.subr.mxu0 0.0
    %335 = vmatpush1.msra.mxu0 %v98
    %336 = vmatprep.subr.mxu0 0.0
    %337 = vmatpush1.msra.mxu0 %v97
    %338 = vmatprep.subr.mxu0 0.0
    %339 = vmatpush1.msra.mxu0 %v96
    %340 = vmatprep.subr.mxu0 0.0
    %341 = vmatpush1.msra.mxu0 %v95
    %342 = vmatprep.subr.mxu0 0.0
    %343 = vmatpush1.msra.mxu0 %v94
    %344 = vmatprep.subr.mxu0 0.0
    %345 = vmatpush1.msra.mxu0 %v93
    %346 = vmatprep.subr.mxu0 0.0
    %347 = vmatpush1.msra.mxu0 %v92
    %348 = vmatprep.subr.mxu0 0.0
    %349 = vmatpush1.msra.mxu0 %v91
    %350 = vmatprep.subr.mxu0 0.0
    %351 = vmatpush1.msra.mxu0 %v90
    %352 = vmatprep.subr.mxu0 0.0
    %353 = vmatpush1.msra.mxu0 %v89
    %354 = vmatprep.subr.mxu0 0.0
    %355 = vmatpush1.msra.mxu0 %v88
    %356 = vmatprep.subr.mxu0 0.0
    %357 = vmatpush1.msra.mxu0 %v87
    %358 = vmatprep.subr.mxu0 0.0
    %359 = vmatpush1.msra.mxu0 %v86
    %360 = vmatprep.subr.mxu0 0.0
    %361 = vmatpush1.msra.mxu0 %v85
    %362 = vmatprep.subr.mxu0 0.0
    %363 = vmatpush1.msra.mxu0 %v84
    %364 = vmatprep.subr.mxu0 0.0
    %365 = vmatpush2.msra.mxu0 %v115
    %366 = vmatprep.subr.mxu0 0.0
    %367 = vmatpush2.msra.mxu0 %v114
    %368 = vmatprep.subr.mxu0 0.0
    %369 = vmatpush2.msra.mxu0 %v113
    %370 = vmatprep.subr.mxu0 0.0
    %371 = vmatpush2.msra.mxu0 %v112
    %372 = vmatprep.subr.mxu0 0.0
    %373 = vmatpush2.msra.mxu0 %v111
    %374 = vmatprep.subr.mxu0 0.0
    %375 = vmatpush2.msra.mxu0 %v110
    %376 = vmatprep.subr.mxu0 0.0
    %377 = vmatpush2.msra.mxu0 %v109
    %378 = vmatprep.subr.mxu0 0.0
    %379 = vmatpush2.msra.mxu0 %v108
    %380 = vmatprep.subr.mxu0 0.0
    %381 = vmatpush2.msra.mxu0 %v107
    %382 = vmatprep.subr.mxu0 0.0
    %383 = vmatpush2.msra.mxu0 %v106
    %384 = vmatprep.subr.mxu0 0.0
    %385 = vmatpush2.msra.mxu0 %v105
    %386 = vmatprep.subr.mxu0 0.0
    %387 = vmatpush2.msra.mxu0 %v104
    %388 = vmatprep.subr.mxu0 0.0
    %389 = vmatpush2.msra.mxu0 %v103
    %390 = vmatprep.subr.mxu0 0.0
    %391 = vmatpush2.msra.mxu0 %v102
    %392 = vmatprep.subr.mxu0 0.0
    %393 = vmatpush2.msra.mxu0 %v101
    %394 = vmatprep.subr.mxu0 0.0
    %395 = vmatpush2.msra.mxu0 %v100
    %396 = vmatprep.mubr.f32.mxu0 %v182
    %397 = vmatmul.mubr.f32.gmra.mxu0 %v174
    %v398 = vpop.f32.mrf.mxu0
    %v399 = vadd.f32 %v329, %v398
    %v400 = vpop.f32.mrf.mxu0
    %401 = vdwg.mxu0
    %402 = vmatprep.subr.mxu0 0.0
    %403 = vmatpush1.msra.mxu0 %v131
    %404 = vmatprep.subr.mxu0 0.0
    %405 = vmatpush1.msra.mxu0 %v130
    %406 = vmatprep.subr.mxu0 0.0
    %407 = vmatpush1.msra.mxu0 %v129
    %408 = vmatprep.subr.mxu0 0.0
    %409 = vmatpush1.msra.mxu0 %v128
    %410 = vmatprep.subr.mxu0 0.0
    %411 = vmatpush1.msra.mxu0 %v127
    %412 = vmatprep.subr.mxu0 0.0
    %413 = vmatpush1.msra.mxu0 %v126
    %414 = vmatprep.subr.mxu0 0.0
    %415 = vmatpush1.msra.mxu0 %v125
    %416 = vmatprep.subr.mxu0 0.0
    %417 = vmatpush1.msra.mxu0 %v124
    %418 = vmatprep.subr.mxu0 0.0
    %419 = vmatpush1.msra.mxu0 %v123
    %420 = vmatprep.subr.mxu0 0.0
    %421 = vmatpush1.msra.mxu0 %v122
    %422 = vmatprep.subr.mxu0 0.0
    %423 = vmatpush1.msra.mxu0 %v121
    %424 = vmatprep.subr.mxu0 0.0
    %425 = vmatpush1.msra.mxu0 %v120
    %426 = vmatprep.subr.mxu0 0.0
    %427 = vmatpush1.msra.mxu0 %v119
    %428 = vmatprep.subr.mxu0 0.0
    %429 = vmatpush1.msra.mxu0 %v118
    %430 = vmatprep.subr.mxu0 0.0
    %431 = vmatpush1.msra.mxu0 %v117
    %432 = vmatprep.subr.mxu0 0.0
    %433 = vmatpush1.msra.mxu0 %v116
    %434 = vmatprep.subr.mxu0 0.0
    %435 = vmatpush2.msra.mxu0 %v147
    %436 = vmatprep.subr.mxu0 0.0
    %437 = vmatpush2.msra.mxu0 %v146
    %438 = vmatprep.subr.mxu0 0.0
    %439 = vmatpush2.msra.mxu0 %v145
    %440 = vmatprep.subr.mxu0 0.0
    %441 = vmatpush2.msra.mxu0 %v144
    %442 = vmatprep.subr.mxu0 0.0
    %443 = vmatpush2.msra.mxu0 %v143
    %444 = vmatprep.subr.mxu0 0.0
    %445 = vmatpush2.msra.mxu0 %v142
    %446 = vmatprep.subr.mxu0 0.0
    %447 = vmatpush2.msra.mxu0 %v141
    %448 = vmatprep.subr.mxu0 0.0
    %449 = vmatpush2.msra.mxu0 %v140
    %450 = vmatprep.subr.mxu0 0.0
    %451 = vmatpush2.msra.mxu0 %v139
    %452 = vmatprep.subr.mxu0 0.0
    %453 = vmatpush2.msra.mxu0 %v138
    %454 = vmatprep.subr.mxu0 0.0
    %455 = vmatpush2.msra.mxu0 %v137
    %456 = vmatprep.subr.mxu0 0.0
    %457 = vmatpush2.msra.mxu0 %v136
    %458 = vmatprep.subr.mxu0 0.0
    %459 = vmatpush2.msra.mxu0 %v135
    %460 = vmatprep.subr.mxu0 0.0
    %461 = vmatpush2.msra.mxu0 %v134
    %462 = vmatprep.subr.mxu0 0.0
    %463 = vmatpush2.msra.mxu0 %v133
    %464 = vmatprep.subr.mxu0 0.0
    %465 = vmatpush2.msra.mxu0 %v132
    %466 = vmatprep.mubr.f32.mxu0 %v183
    %467 = vmatmul.mubr.f32.gmra.mxu0 %v181
    %v468 = vpop.f32.mrf.mxu0
    %v469 = vadd.f32 %v399, %v468
    %v470 = vpop.f32.mrf.mxu0
    %471 = vdwg.mxu0
    %v472 = vld [vmem:[%s2] sm:$0x1]
    %v473 = vmul.f32 %v469, 2.0
    %v475 = vlaneseq
    %v476 = vshrl.u32 %v475, 7
    %v477 = vsub.s32 0, %v476
    %v478 = vrot.slane %v472, %v477
    %v480 = vsub.f32 %v478, %v473
    %vm481 = vcmask 254976
    %v482 = vsel %vm481, %v480, inf
    %483 = vmin.xlane.f32.xlu0 %v482
    %v484 = vpop.xlane.xlu0 %483
    %v485 = vlaneseq
    %v486 = vand.u32 %v485, 127
    %vm487 = vcmp.eq.f32.partialorder %v480, %v484
    %v488 = vsel %vm487, %v486, 32
    %v489 = vsel %vm481, %v488, 2147483647
    %v490 = vand.u32 %v489, 65535
    %v491 = vshra.s32 %v489, 16
    %v492 = vcvt.s32.f32 %v490
    %v493 = vcvt.s32.f32 %v491
    %494 = vmin.xlane.f32.xlu0 %v493
    %v495 = vpop.xlane.xlu0 %494
    %vm496 = vcmp.eq.f32.partialorder %v493, %v495
    %v497 = vsel %vm496, %v492, inf
    %498 = vmin.xlane.f32.xlu0 %v497
    %v499 = vpop.xlane.xlu0 %498
    %v500 = vcvt.f32.s32 %v499
    %v501 = vcvt.f32.s32 %v495
    %v502 = vshll.u32 %v501, 16
    %v503 = vadd.s32 %v502, %v500
    %vm504 = vcmp.eq.s32.totalorder %v486, %v503
    %v505 = vsel %vm504, 1, 0
    %v506 = vcvt.s32.f32 %v505
    %v507 = vld [vmem:[%s3] sm:$0xff]
    %v508 = vld [vmem:[%s3 + $0x8] sm:$0xff]
    %v509 = vld [vmem:[%s3 + $0x10] sm:$0xff]
    %v510 = vld [vmem:[%s3 + $0x18] sm:$0xff]
    %v511 = vld [vmem:[%s3 + $0x20] sm:$0xff]
    %v512 = vld [vmem:[%s3 + $0x28] sm:$0xff]
    %v513 = vld [vmem:[%s3 + $0x30] sm:$0xff]
    %v514 = vld [vmem:[%s3 + $0x38] sm:$0xff]
    %v515 = vld [vmem:[%s3 + $0x40] sm:$0xff]
    %v516 = vld [vmem:[%s3 + $0x48] sm:$0xff]
    %v517 = vld [vmem:[%s3 + $0x50] sm:$0xff]
    %v518 = vld [vmem:[%s3 + $0x58] sm:$0xff]
    %v519 = vld [vmem:[%s3 + $0x60] sm:$0xff]
    %v520 = vld [vmem:[%s3 + $0x68] sm:$0xff]
    %v521 = vld [vmem:[%s3 + $0x70] sm:$0xff]
    %v522 = vld [vmem:[%s3 + $0x78] sm:$0xff]
    %v523 = vld [vmem:[%s3 + $0x80] sm:$0xff]
    %v524 = vld [vmem:[%s3 + $0x88] sm:$0xff]
    %v525 = vld [vmem:[%s3 + $0x90] sm:$0xff]
    %v526 = vld [vmem:[%s3 + $0x98] sm:$0xff]
    %v527 = vld [vmem:[%s3 + $0xa0] sm:$0xff]
    %v528 = vld [vmem:[%s3 + $0xa8] sm:$0xff]
    %v529 = vld [vmem:[%s3 + $0xb0] sm:$0xff]
    %v530 = vld [vmem:[%s3 + $0xb8] sm:$0xff]
    %v531 = vld [vmem:[%s3 + $0xc0] sm:$0xff]
    %v532 = vld [vmem:[%s3 + $0xc8] sm:$0xff]
    %v533 = vld [vmem:[%s3 + $0xd0] sm:$0xff]
    %v534 = vld [vmem:[%s3 + $0xd8] sm:$0xff]
    %v535 = vld [vmem:[%s3 + $0xe0] sm:$0xff]
    %v536 = vld [vmem:[%s3 + $0xe8] sm:$0xff]
    %v537 = vld [vmem:[%s3 + $0xf0] sm:$0xff]
    %v538 = vld [vmem:[%s3 + $0xf8] sm:$0xff]
    %v539 = vld [vmem:[%s3 + $0x100] sm:$0xff]
    %v540 = vld [vmem:[%s3 + $0x108] sm:$0xff]
    %v541 = vld [vmem:[%s3 + $0x110] sm:$0xff]
    %v542 = vld [vmem:[%s3 + $0x118] sm:$0xff]
    %vm543 = vcmask 261120
    %v545 = vsel %vm543, %v506, 0
    %547 = vmatprep.subr.mxu0 0.0
    %548 = vmatpush1.msra.mxu0 0.0
    %549 = vmatprep.subr.mxu0 0.0
    %550 = vmatpush1.msra.mxu0 0.0
    %551 = vmatprep.subr.mxu0 0.0
    %552 = vmatpush1.msra.mxu0 0.0
    %553 = vmatprep.subr.mxu0 0.0
    %554 = vmatpush1.msra.mxu0 0.0
    %555 = vmatprep.subr.mxu0 0.0
    %556 = vmatpush1.msra.mxu0 0.0
    %557 = vmatprep.subr.mxu0 0.0
    %558 = vmatpush1.msra.mxu0 0.0
    %559 = vmatprep.subr.mxu0 0.0
    %560 = vmatpush1.msra.mxu0 0.0
    %561 = vmatprep.subr.mxu0 0.0
    %562 = vmatpush1.msra.mxu0 0.0
    %563 = vmatprep.subr.mxu0 0.0
    %564 = vmatpush1.msra.mxu0 0.0
    %565 = vmatprep.subr.mxu0 0.0
    %566 = vmatpush1.msra.mxu0 0.0
    %567 = vmatprep.subr.mxu0 0.0
    %568 = vmatpush1.msra.mxu0 0.0
    %569 = vmatprep.subr.mxu0 0.0
    %570 = vmatpush1.msra.mxu0 0.0
    %571 = vmatprep.subr.mxu0 %v535
    %572 = vmatpush1.msra.mxu0 %v534
    %573 = vmatprep.subr.mxu0 %v526
    %574 = vmatpush1.msra.mxu0 %v525
    %575 = vmatprep.subr.mxu0 %v517
    %576 = vmatpush1.msra.mxu0 %v516
    %577 = vmatprep.subr.mxu0 %v508
    %578 = vmatpush1.msra.mxu0 %v507
    %579 = vmatprep.subr.mxu0 0.0
    %580 = vmatpush2.msra.mxu0 0.0
    %581 = vmatprep.subr.mxu0 0.0
    %582 = vmatpush2.msra.mxu0 0.0
    %583 = vmatprep.subr.mxu0 0.0
    %584 = vmatpush2.msra.mxu0 0.0
    %585 = vmatprep.subr.mxu0 0.0
    %586 = vmatpush2.msra.mxu0 0.0
    %587 = vmatprep.subr.mxu0 0.0
    %588 = vmatpush2.msra.mxu0 0.0
    %589 = vmatprep.subr.mxu0 0.0
    %590 = vmatpush2.msra.mxu0 0.0
    %591 = vmatprep.subr.mxu0 0.0
    %592 = vmatpush2.msra.mxu0 0.0
    %593 = vmatprep.subr.mxu0 0.0
    %594 = vmatpush2.msra.mxu0 0.0
    %595 = vmatprep.subr.mxu0 0.0
    %596 = vmatpush2.msra.mxu0 0.0
    %597 = vmatprep.subr.mxu0 0.0
    %598 = vmatpush2.msra.mxu0 0.0
    %599 = vmatprep.subr.mxu0 0.0
    %600 = vmatpush2.msra.mxu0 0.0
    %601 = vmatprep.subr.mxu0 0.0
    %602 = vmatpush2.msra.mxu0 0.0
    %603 = vmatprep.subr.mxu0 0.0
    %604 = vmatpush2.msra.mxu0 0.0
    %605 = vmatprep.subr.mxu0 0.0
    %606 = vmatpush2.msra.mxu0 0.0
    %607 = vmatprep.subr.mxu0 0.0
    %608 = vmatpush2.msra.mxu0 0.0
    %609 = vmatprep.subr.mxu0 0.0
    %610 = vmatpush2.msra.mxu0 0.0
    %611 = vmatprep.mubr.f32.mxu0 0.0
    %612 = vmatmul.mubr.f32.gmra.mxu0 %v545
    %v613 = vpop.f32.mrf.mxu0
    %v614 = vadd.f32 0.0, %v613
    %v615 = vpop.f32.mrf.mxu0
    %v616 = vadd.f32 0.0, %v615
    %617 = vdwg.mxu0
    %618 = vmatprep.subr.mxu0 0.0
    %619 = vmatpush1.msra.mxu0 0.0
    %620 = vmatprep.subr.mxu0 0.0
    %621 = vmatpush1.msra.mxu0 0.0
    %622 = vmatprep.subr.mxu0 0.0
    %623 = vmatpush1.msra.mxu0 0.0
    %624 = vmatprep.subr.mxu0 0.0
    %625 = vmatpush1.msra.mxu0 0.0
    %626 = vmatprep.subr.mxu0 0.0
    %627 = vmatpush1.msra.mxu0 0.0
    %628 = vmatprep.subr.mxu0 0.0
    %629 = vmatpush1.msra.mxu0 0.0
    %630 = vmatprep.subr.mxu0 0.0
    %631 = vmatpush1.msra.mxu0 0.0
    %632 = vmatprep.subr.mxu0 0.0
    %633 = vmatpush1.msra.mxu0 0.0
    %634 = vmatprep.subr.mxu0 0.0
    %635 = vmatpush1.msra.mxu0 0.0
    %636 = vmatprep.subr.mxu0 0.0
    %637 = vmatpush1.msra.mxu0 0.0
    %638 = vmatprep.subr.mxu0 0.0
    %639 = vmatpush1.msra.mxu0 0.0
    %640 = vmatprep.subr.mxu0 0.0
    %641 = vmatpush1.msra.mxu0 0.0
    %642 = vmatprep.subr.mxu0 %v537
    %643 = vmatpush1.msra.mxu0 %v536
    %644 = vmatprep.subr.mxu0 %v528
    %645 = vmatpush1.msra.mxu0 %v527
    %646 = vmatprep.subr.mxu0 %v519
    %647 = vmatpush1.msra.mxu0 %v518
    %648 = vmatprep.subr.mxu0 %v510
    %649 = vmatpush1.msra.mxu0 %v509
    %650 = vmatprep.subr.mxu0 0.0
    %651 = vmatpush2.msra.mxu0 0.0
    %652 = vmatprep.subr.mxu0 0.0
    %653 = vmatpush2.msra.mxu0 0.0
    %654 = vmatprep.subr.mxu0 0.0
    %655 = vmatpush2.msra.mxu0 0.0
    %656 = vmatprep.subr.mxu0 0.0
    %657 = vmatpush2.msra.mxu0 0.0
    %658 = vmatprep.subr.mxu0 0.0
    %659 = vmatpush2.msra.mxu0 0.0
    %660 = vmatprep.subr.mxu0 0.0
    %661 = vmatpush2.msra.mxu0 0.0
    %662 = vmatprep.subr.mxu0 0.0
    %663 = vmatpush2.msra.mxu0 0.0
    %664 = vmatprep.subr.mxu0 0.0
    %665 = vmatpush2.msra.mxu0 0.0
    %666 = vmatprep.subr.mxu0 0.0
    %667 = vmatpush2.msra.mxu0 0.0
    %668 = vmatprep.subr.mxu0 0.0
    %669 = vmatpush2.msra.mxu0 0.0
    %670 = vmatprep.subr.mxu0 0.0
    %671 = vmatpush2.msra.mxu0 0.0
    %672 = vmatprep.subr.mxu0 0.0
    %673 = vmatpush2.msra.mxu0 0.0
    %674 = vmatprep.subr.mxu0 0.0
    %675 = vmatpush2.msra.mxu0 0.0
    %676 = vmatprep.subr.mxu0 0.0
    %677 = vmatpush2.msra.mxu0 0.0
    %678 = vmatprep.subr.mxu0 0.0
    %679 = vmatpush2.msra.mxu0 0.0
    %680 = vmatprep.subr.mxu0 0.0
    %681 = vmatpush2.msra.mxu0 0.0
    %682 = vmatprep.mubr.f32.mxu0 0.0
    %683 = vmatmul.mubr.f32.gmra.mxu0 %v545
    %v684 = vpop.f32.mrf.mxu0
    %v685 = vadd.f32 0.0, %v684
    %v686 = vpop.f32.mrf.mxu0
    %v687 = vadd.f32 0.0, %v686
    %688 = vdwg.mxu0
    %689 = vmatprep.subr.mxu0 0.0
    %690 = vmatpush1.msra.mxu0 0.0
    %691 = vmatprep.subr.mxu0 0.0
    %692 = vmatpush1.msra.mxu0 0.0
    %693 = vmatprep.subr.mxu0 0.0
    %694 = vmatpush1.msra.mxu0 0.0
    %695 = vmatprep.subr.mxu0 0.0
    %696 = vmatpush1.msra.mxu0 0.0
    %697 = vmatprep.subr.mxu0 0.0
    %698 = vmatpush1.msra.mxu0 0.0
    %699 = vmatprep.subr.mxu0 0.0
    %700 = vmatpush1.msra.mxu0 0.0
    %701 = vmatprep.subr.mxu0 0.0
    %702 = vmatpush1.msra.mxu0 0.0
    %703 = vmatprep.subr.mxu0 0.0
    %704 = vmatpush1.msra.mxu0 0.0
    %705 = vmatprep.subr.mxu0 0.0
    %706 = vmatpush1.msra.mxu0 0.0
    %707 = vmatprep.subr.mxu0 0.0
    %708 = vmatpush1.msra.mxu0 0.0
    %709 = vmatprep.subr.mxu0 0.0
    %710 = vmatpush1.msra.mxu0 0.0
    %711 = vmatprep.subr.mxu0 0.0
    %712 = vmatpush1.msra.mxu0 0.0
    %713 = vmatprep.subr.mxu0 %v539
    %714 = vmatpush1.msra.mxu0 %v538
    %715 = vmatprep.subr.mxu0 %v530
    %716 = vmatpush1.msra.mxu0 %v529
    %717 = vmatprep.subr.mxu0 %v521
    %718 = vmatpush1.msra.mxu0 %v520
    %719 = vmatprep.subr.mxu0 %v512
    %720 = vmatpush1.msra.mxu0 %v511
    %721 = vmatprep.subr.mxu0 0.0
    %722 = vmatpush2.msra.mxu0 0.0
    %723 = vmatprep.subr.mxu0 0.0
    %724 = vmatpush2.msra.mxu0 0.0
    %725 = vmatprep.subr.mxu0 0.0
    %726 = vmatpush2.msra.mxu0 0.0
    %727 = vmatprep.subr.mxu0 0.0
    %728 = vmatpush2.msra.mxu0 0.0
    %729 = vmatprep.subr.mxu0 0.0
    %730 = vmatpush2.msra.mxu0 0.0
    %731 = vmatprep.subr.mxu0 0.0
    %732 = vmatpush2.msra.mxu0 0.0
    %733 = vmatprep.subr.mxu0 0.0
    %734 = vmatpush2.msra.mxu0 0.0
    %735 = vmatprep.subr.mxu0 0.0
    %736 = vmatpush2.msra.mxu0 0.0
    %737 = vmatprep.subr.mxu0 0.0
    %738 = vmatpush2.msra.mxu0 0.0
    %739 = vmatprep.subr.mxu0 0.0
    %740 = vmatpush2.msra.mxu0 0.0
    %741 = vmatprep.subr.mxu0 0.0
    %742 = vmatpush2.msra.mxu0 0.0
    %743 = vmatprep.subr.mxu0 0.0
    %744 = vmatpush2.msra.mxu0 0.0
    %745 = vmatprep.subr.mxu0 0.0
    %746 = vmatpush2.msra.mxu0 0.0
    %747 = vmatprep.subr.mxu0 0.0
    %748 = vmatpush2.msra.mxu0 0.0
    %749 = vmatprep.subr.mxu0 0.0
    %750 = vmatpush2.msra.mxu0 0.0
    %751 = vmatprep.subr.mxu0 0.0
    %752 = vmatpush2.msra.mxu0 0.0
    %753 = vmatprep.mubr.f32.mxu0 0.0
    %754 = vmatmul.mubr.f32.gmra.mxu0 %v545
    %v755 = vpop.f32.mrf.mxu0
    %v756 = vadd.f32 0.0, %v755
    %v757 = vpop.f32.mrf.mxu0
    %v758 = vadd.f32 0.0, %v757
    %759 = vdwg.mxu0
    %760 = vmatprep.subr.mxu0 0.0
    %761 = vmatpush1.msra.mxu0 0.0
    %762 = vmatprep.subr.mxu0 0.0
    %763 = vmatpush1.msra.mxu0 0.0
    %764 = vmatprep.subr.mxu0 0.0
    %765 = vmatpush1.msra.mxu0 0.0
    %766 = vmatprep.subr.mxu0 0.0
    %767 = vmatpush1.msra.mxu0 0.0
    %768 = vmatprep.subr.mxu0 0.0
    %769 = vmatpush1.msra.mxu0 0.0
    %770 = vmatprep.subr.mxu0 0.0
    %771 = vmatpush1.msra.mxu0 0.0
    %772 = vmatprep.subr.mxu0 0.0
    %773 = vmatpush1.msra.mxu0 0.0
    %774 = vmatprep.subr.mxu0 0.0
    %775 = vmatpush1.msra.mxu0 0.0
    %776 = vmatprep.subr.mxu0 0.0
    %777 = vmatpush1.msra.mxu0 0.0
    %778 = vmatprep.subr.mxu0 0.0
    %779 = vmatpush1.msra.mxu0 0.0
    %780 = vmatprep.subr.mxu0 0.0
    %781 = vmatpush1.msra.mxu0 0.0
    %782 = vmatprep.subr.mxu0 0.0
    %783 = vmatpush1.msra.mxu0 0.0
    %784 = vmatprep.subr.mxu0 %v541
    %785 = vmatpush1.msra.mxu0 %v540
    %786 = vmatprep.subr.mxu0 %v532
    %787 = vmatpush1.msra.mxu0 %v531
    %788 = vmatprep.subr.mxu0 %v523
    %789 = vmatpush1.msra.mxu0 %v522
    %790 = vmatprep.subr.mxu0 %v514
    %791 = vmatpush1.msra.mxu0 %v513
    %792 = vmatprep.subr.mxu0 0.0
    %793 = vmatpush2.msra.mxu0 0.0
    %794 = vmatprep.subr.mxu0 0.0
    %795 = vmatpush2.msra.mxu0 0.0
    %796 = vmatprep.subr.mxu0 0.0
    %797 = vmatpush2.msra.mxu0 0.0
    %798 = vmatprep.subr.mxu0 0.0
    %799 = vmatpush2.msra.mxu0 0.0
    %800 = vmatprep.subr.mxu0 0.0
    %801 = vmatpush2.msra.mxu0 0.0
    %802 = vmatprep.subr.mxu0 0.0
    %803 = vmatpush2.msra.mxu0 0.0
    %804 = vmatprep.subr.mxu0 0.0
    %805 = vmatpush2.msra.mxu0 0.0
    %806 = vmatprep.subr.mxu0 0.0
    %807 = vmatpush2.msra.mxu0 0.0
    %808 = vmatprep.subr.mxu0 0.0
    %809 = vmatpush2.msra.mxu0 0.0
    %810 = vmatprep.subr.mxu0 0.0
    %811 = vmatpush2.msra.mxu0 0.0
    %812 = vmatprep.subr.mxu0 0.0
    %813 = vmatpush2.msra.mxu0 0.0
    %814 = vmatprep.subr.mxu0 0.0
    %815 = vmatpush2.msra.mxu0 0.0
    %816 = vmatprep.subr.mxu0 0.0
    %817 = vmatpush2.msra.mxu0 0.0
    %818 = vmatprep.subr.mxu0 0.0
    %819 = vmatpush2.msra.mxu0 0.0
    %820 = vmatprep.subr.mxu0 0.0
    %821 = vmatpush2.msra.mxu0 0.0
    %822 = vmatprep.subr.mxu0 0.0
    %823 = vmatpush2.msra.mxu0 0.0
    %824 = vmatprep.mubr.f32.mxu0 0.0
    %825 = vmatmul.mubr.f32.gmra.mxu0 %v545
    %v826 = vpop.f32.mrf.mxu0
    %v827 = vadd.f32 0.0, %v826
    %v828 = vpop.f32.mrf.mxu0
    %v829 = vadd.f32 0.0, %v828
    %830 = vdwg.mxu0
    %831 = vmatprep.subr.mxu0 0.0
    %832 = vmatpush1.msra.mxu0 0.0
    %833 = vmatprep.subr.mxu0 0.0
    %834 = vmatpush1.msra.mxu0 0.0
    %835 = vmatprep.subr.mxu0 0.0
    %836 = vmatpush1.msra.mxu0 0.0
    %837 = vmatprep.subr.mxu0 0.0
    %838 = vmatpush1.msra.mxu0 0.0
    %839 = vmatprep.subr.mxu0 0.0
    %840 = vmatpush1.msra.mxu0 0.0
    %841 = vmatprep.subr.mxu0 0.0
    %842 = vmatpush1.msra.mxu0 0.0
    %843 = vmatprep.subr.mxu0 0.0
    %844 = vmatpush1.msra.mxu0 0.0
    %845 = vmatprep.subr.mxu0 0.0
    %846 = vmatpush1.msra.mxu0 0.0
    %847 = vmatprep.subr.mxu0 0.0
    %848 = vmatpush1.msra.mxu0 0.0
    %849 = vmatprep.subr.mxu0 0.0
    %850 = vmatpush1.msra.mxu0 0.0
    %851 = vmatprep.subr.mxu0 0.0
    %852 = vmatpush1.msra.mxu0 0.0
    %853 = vmatprep.subr.mxu0 0.0
    %854 = vmatpush1.msra.mxu0 0.0
    %855 = vmatprep.subr.mxu0 0.0
    %856 = vmatpush1.msra.mxu0 %v542
    %857 = vmatprep.subr.mxu0 0.0
    %858 = vmatpush1.msra.mxu0 %v533
    %859 = vmatprep.subr.mxu0 0.0
    %860 = vmatpush1.msra.mxu0 %v524
    %861 = vmatprep.subr.mxu0 0.0
    %862 = vmatpush1.msra.mxu0 %v515
    %863 = vmatprep.subr.mxu0 0.0
    %864 = vmatpush2.msra.mxu0 0.0
    %865 = vmatprep.subr.mxu0 0.0
    %866 = vmatpush2.msra.mxu0 0.0
    %867 = vmatprep.subr.mxu0 0.0
    %868 = vmatpush2.msra.mxu0 0.0
    %869 = vmatprep.subr.mxu0 0.0
    %870 = vmatpush2.msra.mxu0 0.0
    %871 = vmatprep.subr.mxu0 0.0
    %872 = vmatpush2.msra.mxu0 0.0
    %873 = vmatprep.subr.mxu0 0.0
    %874 = vmatpush2.msra.mxu0 0.0
    %875 = vmatprep.subr.mxu0 0.0
    %876 = vmatpush2.msra.mxu0 0.0
    %877 = vmatprep.subr.mxu0 0.0
    %878 = vmatpush2.msra.mxu0 0.0
    %879 = vmatprep.subr.mxu0 0.0
    %880 = vmatpush2.msra.mxu0 0.0
    %881 = vmatprep.subr.mxu0 0.0
    %882 = vmatpush2.msra.mxu0 0.0
    %883 = vmatprep.subr.mxu0 0.0
    %884 = vmatpush2.msra.mxu0 0.0
    %885 = vmatprep.subr.mxu0 0.0
    %886 = vmatpush2.msra.mxu0 0.0
    %887 = vmatprep.subr.mxu0 0.0
    %888 = vmatpush2.msra.mxu0 0.0
    %889 = vmatprep.subr.mxu0 0.0
    %890 = vmatpush2.msra.mxu0 0.0
    %891 = vmatprep.subr.mxu0 0.0
    %892 = vmatpush2.msra.mxu0 0.0
    %893 = vmatprep.subr.mxu0 0.0
    %894 = vmatpush2.msra.mxu0 0.0
    %895 = vmatprep.mubr.f32.mxu0 0.0
    %896 = vmatmul.mubr.f32.gmra.mxu0 %v545
    %v897 = vpop.f32.mrf.mxu0
    %v898 = vadd.f32 0.0, %v897
    %v899 = vpop.f32.mrf.mxu0
    %900 = vdwg.mxu0
    %v910 = vcombine.low %v614, %v616
    %v911 = vcombine.low %v685, %v687
    %v913 = vunpack.c.l.s4 1983009808
    %v914 = vunpack.c.0.s8 %v913
    %v915 = vlaneseq
    %v916 = vshrl.u32 %v915, 7
    %v917 = vsub.s32 %v914, %v916
    %v918 = vrot.slane %v910, %v917
    %v920 = vunpack.c.l.s4 1983009808
    %v921 = vunpack.c.0.s8 %v920
    %v922 = vlaneseq
    %v923 = vshrl.u32 %v922, 7
    %v924 = vsub.s32 %v921, %v923
    %v925 = vrot.slane %v911, %v924
    %v926 = vcombine.low %v918, %v925
    %v927 = vcombine.low %v756, %v758
    %v928 = vcombine.low %v827, %v829
    %v930 = vunpack.c.l.s4 1983009808
    %v931 = vunpack.c.0.s8 %v930
    %v932 = vlaneseq
    %v933 = vshrl.u32 %v932, 7
    %v934 = vsub.s32 %v931, %v933
    %v935 = vrot.slane %v927, %v934
    %v937 = vunpack.c.l.s4 1983009808
    %v938 = vunpack.c.0.s8 %v937
    %v939 = vlaneseq
    %v940 = vshrl.u32 %v939, 7
    %v941 = vsub.s32 %v938, %v940
    %v942 = vrot.slane %v928, %v941
    %v943 = vcombine.low %v935, %v942
    %v945 = vunpack.c.l.s4 1983009808
    %v946 = vunpack.c.0.s8 %v945
    %v947 = vlaneseq
    %v948 = vshrl.u32 %v947, 7
    %v949 = vsub.s32 %v946, %v948
    %v950 = vrot.slane %v898, %v949
    %954 = vst [vmem:[#allocation2] sm:$0xff] %v926
    %955 = vst [vmem:[#allocation2 + $0x8] sm:$0xff] %v943
    %956 = vst [vmem:[#allocation2 + $0x10] sm:$0x3] %v950
    // Predicated region
    $region18: #{tpu_custom_call.1} parent=1 // pred_check
      _
    $region19: #{tpu_custom_call.1} parent=1 // pred_check_branch
      %958 = sbr.rel (0) target = $region21
    $region20: #{tpu_custom_call.1} parent=1 // pred_region
      %s960 = ssub.s32 288, 288
      %961 = vsyncadd [#allocation3], %s960
      %s963 = sshll.u32 [#allocation2], 4
      %s964 = int_to_ptr.vmem [resolvable:$true] %s963
      %966 = dma.vmem_to_hbm [thread:$0]  %s964, 288, %s4, [#allocation3]
    $region21: #{tpu_custom_call.1} parent=1 // pred_fallthru
      _
    // Predicated region
    $region22: #{tpu_custom_call.1} parent=1 // pred_check
      _
    $region23: #{tpu_custom_call.1} parent=1 // pred_check_branch
      %968 = sbr.rel (0) target = $region25
    $region24: #{tpu_custom_call.1} parent=1 // pred_region
      %969 = dma.done [#allocation3], 288
    $region25: #{tpu_custom_call.1} parent=1 // pred_fallthru
      _
    %970 = vsyncpa [#allocation3], 1

</llo_original>
